<compile_context>
chip_gen: v7x
topology: tpu7x:2x2x1
jax: 0.10.0
libtpu: 0.0.40
codegen_flags: <defaults>
</compile_context>

<pallas_src>
from functools import partial

import jax
import jax.numpy as jnp
from jax import lax
from jax.experimental import pallas as pl
from jax.experimental.pallas import tpu as pltpu


def attention_gate_kernel(x_ref, xtop_ref, xbot_ref, sk_ref, sktop_ref,
                          wn_ref, wd_ref, bn_ref, bd_ref, wc_ref, bc_ref,
                          out_ref):
    """One (batch, row-tile) grid step.

    x_ref     : (TH, W, C)    bf16  x rows [p0, p0+TH)
    xtop_ref  : (1, W, C)     bf16  x row p0-1   (zeroed in-kernel when h == 0)
    xbot_ref  : (1, W, C)     bf16  x row p0+TH  (zeroed for the last tile)
    sk_ref    : (2TH, W, 2C)  bf16  skip tile, column parity folded into lanes
    sktop_ref : (1, W, 2C)    bf16  skip row 2*p0-1 (zeroed when h == 0)
    wn_ref    : (3, 3C, Co)   bf16  x-conv weights grouped by kw:  [dj, di*C+c, o]
    wd_ref    : (3, 3C, Co)   bf16  skip-conv weights grouped by kh:[di, dj*C+c, o]
    bn/bd     : (1, Co) f32    wc : (1, Co) f32    bc : (1, 1) f32
    out_ref   : (2TH, W, 2C)  bf16  gated skip, folded layout
    """
    TH, W, C = x_ref.shape
    f32 = jnp.float32
    h = pl.program_id(1)
    n_h = pl.num_programs(1)

    # ---- halo rows: zero at the image border (both convs use padding=1) ----
    xtop = xtop_ref[...]
    xtop = jnp.where(h == 0, jnp.zeros_like(xtop), xtop)
    xbot = xbot_ref[...]
    xbot = jnp.where(h == n_h - 1, jnp.zeros_like(xbot), xbot)
    sktop = sktop_ref[...]
    sktop = jnp.where(h == 0, jnp.zeros_like(sktop), sktop)

    # ---- stride-1 3x3 conv on x: three accumulating matmuls with K = 3C ----
    # Row-tap stack (channels di*C+c hold x[p+di-1, q, c]) built once; each
    # column tap dj only needs one shifted view of that stack.
    xrows = jnp.concatenate([xtop, x_ref[...], xbot], axis=0)        # (TH+2, W, C)
    xstack = jnp.concatenate(
        [xrows[0:TH], xrows[1:TH + 1], xrows[2:TH + 2]], axis=-1)    # (TH, W, 3C)
    zx = jnp.zeros((TH, 1, 3 * C), xstack.dtype)
    x_by_dj = (
        jnp.concatenate([zx, xstack[:, :W - 1]], axis=1),            # dj=0: col q-1
        xstack,                                                      # dj=1: col q
        jnp.concatenate([xstack[:, 1:], zx], axis=1),                # dj=2: col q+1
    )
    a = bn_ref[...]                                  # (1, Co) f32, broadcasts
    for dj in range(3):
        a = a + jnp.dot(x_by_dj[dj].reshape(TH * W, 3 * C), wn_ref[dj],
                        preferred_element_type=f32)

    # ---- stride-2 3x3 conv on skip: three accumulating matmuls, K = 3C -----
    # Folded layout: sk[r, q, par*C + c] == skip[2*p0 + r, 2*q + par, c].
    skb = sk_ref[...]                                                # (2TH, W, 2C)
    sk2 = skb.reshape(TH, 2, W, 2 * C)               # free major-dim split
    rows_even = sk2[:, 0]                            # skip rows 2P    (tap di=1)
    rows_odd = sk2[:, 1]                             # skip rows 2P+1  (tap di=2)
    if TH > 1:                                       # skip rows 2P-1  (tap di=0)
        rows_m1 = jnp.concatenate([sktop, rows_odd[:TH - 1]], axis=0)
    else:
        rows_m1 = sktop

    # dj=0 tap (skip column 2Q-1) = odd-column half shifted right by one; the
    # shift is done ONCE for the whole tile (plus the halo row).
    zs = jnp.zeros((2 * TH, 1, C), skb.dtype)
    odd_shift = jnp.concatenate([zs, skb[:, :W - 1, C:]], axis=1)    # (2TH, W, C)
    osh2 = odd_shift.reshape(TH, 2, W, C)
    sh_even, sh_odd = osh2[:, 0], osh2[:, 1]
    zt = jnp.zeros((1, 1, C), skb.dtype)
    sktop_sh = jnp.concatenate([zt, sktop[:, :W - 1, C:]], axis=1)   # (1, W, C)
    if TH > 1:
        sh_m1 = jnp.concatenate([sktop_sh, sh_odd[:TH - 1]], axis=0)
    else:
        sh_m1 = sktop_sh

    d = bd_ref[...]
    groups = ((sh_m1, rows_m1), (sh_even, rows_even), (sh_odd, rows_odd))
    for di, (sh, rg) in enumerate(groups):
        # rg channels are already [dj=1 | dj=2]; prepend the dj=0 tap.
        op = jnp.concatenate([sh, rg], axis=-1)                      # (TH, W, 3C)
        d = d + jnp.dot(op.reshape(TH * W, 3 * C), wd_ref[di],
                        preferred_element_type=f32)

    s = jnp.maximum(a, 0.0) + jnp.maximum(d, 0.0)                    # (TH*W, Co)

    # ---- 1x1 conv -> 1 channel: VPU multiply + lane reduction --------------
    att = jax.nn.sigmoid(
        jnp.sum(s * wc_ref[...], axis=-1, keepdims=True) + bc_ref[...])  # (TH*W, 1)

    # ---- nearest 2x upsample + gate, stored interleaved (folded) in bf16 ---
    # Row doubling = free major-dim broadcast; column doubling is absorbed by
    # the lane broadcast (1 -> 2C) of the folded layout.
    att3 = att.reshape(TH, W, 1)
    att_up = jnp.broadcast_to(att3[:, None, :, :], (TH, 2, W, 1)).reshape(2 * TH, W, 1)
    out_ref[...] = (att_up * skb.astype(f32)).astype(out_ref.dtype)


def _vmem_limits():
    """Return (compiler scoped-VMEM limit, tile-picker budget) in bytes."""
    try:
        cap = pltpu.get_tpu_info().vmem_capacity_bytes
    except Exception:
        cap = 64 * 1024 * 1024
    limit = min(int(cap * 0.75), 100 * 1024 * 1024)
    # Generation-aware safety fraction: roomy on 128 MiB v5e/v6e, conservative
    # on 64 MiB v7x.
    frac = 0.85 if cap >= 100 * 1024 * 1024 else 0.65
    return limit, int(limit * frac)


def _estimate_vmem_bytes(th, W, C, Co):
    """Per-buffer VMEM estimate for one grid step with row tile `th`."""
    bf, f4 = 2, 4
    # Auto-pipelined blocks (double-buffered): x tile, halo rows, folded skip
    # tile, bf16 output tile.
    blocks = (th * W * C + 2 * W * C + 2 * W * C
              + 2 * th * W * 2 * C + 2 * th * W * 2 * C)
    pipeline = 2 * blocks * bf
    # Resident weights/biases (constant index_map; still double-buffered since
    # pl.Buffered(1) is not used).
    weights = 2 * (2 * 9 * C * Co * bf + (3 * Co + 1) * f4)
    # In-kernel temporaries: tap stacks, shifted copies, f32 conv accumulators
    # and the f32 gate temporaries.
    tmp = ((th + 2) * W * C * bf             # xrows
           + 4 * th * W * 3 * C * bf         # xstack + shifted taps + operand copy
           + 2 * th * W * C * bf             # skip odd-column shift
           + 5 * th * W * 2 * C * bf         # skip row groups + per-group operands
           + 3 * th * W * Co * f4            # a, d, s accumulators
           + 4 * th * W * 2 * C * f4)        # f32 gate temporaries
    return pipeline + weights + tmp


def _pick_row_tile(N, H, W, C, Co, budget):
    """Largest row tile TH dividing H that fits the VMEM budget.  When the
    total number of parallel grid steps would be small and odd, prefer an even
    step count (v7x shards the parallel axes across two TensorCores)."""
    fits = [t for t in range(1, H + 1)
            if H % t == 0 and _estimate_vmem_bytes(t, W, C, Co) <= budget]
    if not fits:
        return 1
    best = max(fits)
    steps = N * (H // best)
    if steps % 2 == 1 and steps < 16:
        even = [t for t in fits if (N * (H // t)) % 2 == 0]
        if even:
            best = max(even)
    return best


@partial(jax.jit, static_argnames=("row_tile",))
def attention_gate(x_nchw, skip_nchw, params, row_tile=None):
    """AttentionGate.forward: x (N,C,H,W), skip (N,C,2H,2W) -> (N,C,2H,2W) f32."""
    w_n, b_n, w_d, b_d, w_c, b_c = params
    N, C, H, W = x_nchw.shape
    Co = w_n.shape[0]
    assert skip_nchw.shape == (N, C, 2 * H, 2 * W)
    assert w_c.shape == (1, Co, 1, 1)   # forward requires in_channel == out_channel

    # Mandatory NCHW -> NHWC transposes (+ bf16 cast, fused by XLA).  Every
    # other layout step (conv padding, skip parity fold, 2x upsample
    # interleave) is either free or done inside the kernel.
    x = jnp.transpose(x_nchw, (0, 2, 3, 1)).astype(jnp.bfloat16)         # (N,H,W,C)
    skip = jnp.transpose(skip_nchw, (0, 2, 3, 1)).astype(jnp.bfloat16)   # (N,2H,2W,C)
    skip_f = skip.reshape(N, 2 * H, W, 2 * C)        # free fold of column parity

    # Conv weights pre-stacked as three K=3C blocks so the kernel accumulates
    # three MXU matmuls instead of materialising a (TH*W, 9C) im2col.
    # x conv grouped by kw:   wn3[dj, di*C + c, o] = w_n[o, c, di, dj]
    wn3 = jnp.transpose(w_n, (3, 2, 1, 0)).reshape(3, 3 * C, Co).astype(jnp.bfloat16)
    # skip conv grouped by kh: wd3[di, dj*C + c, o] = w_d[o, c, di, dj]
    wd3 = jnp.transpose(w_d, (2, 3, 1, 0)).reshape(3, 3 * C, Co).astype(jnp.bfloat16)
    bn = b_n.reshape(1, Co).astype(jnp.float32)
    bd = b_d.reshape(1, Co).astype(jnp.float32)
    wc = w_c.reshape(1, Co).astype(jnp.float32)
    bc = b_c.reshape(1, 1).astype(jnp.float32)

    vlim, budget = _vmem_limits()
    TH = row_tile if row_tile is not None else _pick_row_tile(N, H, W, C, Co, budget)
    assert H % TH == 0
    n_h = H // TH

    out_folded = pl.pallas_call(
        attention_gate_kernel,
        out_shape=jax.ShapeDtypeStruct((N, 2 * H, W, 2 * C), jnp.bfloat16),
        grid=(N, n_h),
        in_specs=[
            # x: main tile + one halo row above and below (conv padding = 1).
            pl.BlockSpec((None, TH, W, C), lambda n, h: (n, h, 0, 0)),
            pl.BlockSpec((None, 1, W, C),
                         lambda n, h: (n, jnp.maximum(h * TH - 1, 0), 0, 0)),
            pl.BlockSpec((None, 1, W, C),
                         lambda n, h: (n, jnp.minimum(h * TH + TH, H - 1), 0, 0)),
            # skip (folded): main tile + one halo row above (stride-2 conv).
            pl.BlockSpec((None, 2 * TH, W, 2 * C), lambda n, h: (n, h, 0, 0)),
            pl.BlockSpec((None, 1, W, 2 * C),
                         lambda n, h: (n, jnp.maximum(2 * h * TH - 1, 0), 0, 0)),
            # Weights / biases: constant block index -> fetched once, resident.
            pl.BlockSpec((3, 3 * C, Co), lambda n, h: (0, 0, 0)),
            pl.BlockSpec((3, 3 * C, Co), lambda n, h: (0, 0, 0)),
            pl.BlockSpec((1, Co), lambda n, h: (0, 0)),
            pl.BlockSpec((1, Co), lambda n, h: (0, 0)),
            pl.BlockSpec((1, Co), lambda n, h: (0, 0)),
            pl.BlockSpec((1, 1), lambda n, h: (0, 0)),
        ],
        out_specs=pl.BlockSpec((None, 2 * TH, W, 2 * C), lambda n, h: (n, h, 0, 0)),
        compiler_params=pltpu.CompilerParams(
            dimension_semantics=("parallel", "parallel"),
            vmem_limit_bytes=vlim),
    )(x, x, x, skip_f, skip_f, wn3, wd3, bn, bd, wc, bc)

    # Undo the free channel fold, back to NCHW, restore the module's f32 dtype.
    out = out_folded.reshape(N, 2 * H, 2 * W, C)
    return jnp.transpose(out, (0, 3, 1, 2)).astype(jnp.float32)


def ref_attention_gate(x, skip, params):
    """Pure-JAX reference matching the PyTorch forward (NCHW, f32)."""
    w_n, b_n, w_d, b_d, w_c, b_c = params
    dn = ('NCHW', 'OIHW', 'NCHW')
    a = lax.conv_general_dilated(x, w_n, (1, 1), ((1, 1), (1, 1)),
                                 dimension_numbers=dn) + b_n[None, :, None, None]
    a = jnp.maximum(a, 0.0)
    d = lax.conv_general_dilated(skip, w_d, (2, 2), ((1, 1), (1, 1)),
                                 dimension_numbers=dn) + b_d[None, :, None, None]
    d = jnp.maximum(d, 0.0)
    s = a + d
    att = jax.nn.sigmoid(
        lax.conv_general_dilated(s, w_c, (1, 1), ((0, 0), (0, 0)),
                                 dimension_numbers=dn) + b_c[None, :, None, None])
    att_up = jnp.repeat(jnp.repeat(att, 2, axis=2), 2, axis=3)
    return att_up * skip


if __name__ == "__main__":
    key = jax.random.PRNGKey(0)
    N, C, H, W = 2, 8, 8, 8            # x: (N,C,H,W); skip_x: (N,C,2H,2W)
    Co = C                             # forward only works if in_channel == out_channel
    k = jax.random.split(key, 8)
    x = jax.random.normal(k[0], (N, C, H, W), jnp.float32)
    skip = jax.random.normal(k[1], (N, C, 2 * H, 2 * W), jnp.float32)
    w_n = 0.1 * jax.random.normal(k[2], (Co, C, 3, 3), jnp.float32)
    b_n = 0.1 * jax.random.normal(k[3], (Co,), jnp.float32)
    w_d = 0.1 * jax.random.normal(k[4], (Co, C, 3, 3), jnp.float32)
    b_d = 0.1 * jax.random.normal(k[5], (Co,), jnp.float32)
    w_c = 0.1 * jax.random.normal(k[6], (1, C, 1, 1), jnp.float32)
    b_c = 0.1 * jax.random.normal(k[7], (1,), jnp.float32)
    params = (w_n, b_n, w_d, b_d, w_c, b_c)

    ref = ref_attention_gate(x, skip, params)

    # Default picker (single row tile covering the whole image at this size).
    out = attention_gate(x, skip, params)
    jax.block_until_ready(out)
    assert out.shape == ref.shape == (N, C, 2 * H, 2 * W)
    err = float(jnp.max(jnp.abs(out - ref)))
    # bf16 activations/weights/output with f32 accumulation -> loose tolerance.
    assert jnp.allclose(out, ref, atol=5e-2, rtol=5e-2), err

    # Multi-tile path (exercises the halo-row BlockSpecs), H/TH = 2 tiles.
    out2 = attention_gate(x, skip, params, row_tile=4)
    jax.block_until_ready(out2)
    err2 = float(jnp.max(jnp.abs(out2 - ref)))
    assert jnp.allclose(out2, ref, atol=5e-2, rtol=5e-2), err2

    print("KERNEL_OK")
</pallas_src>

<mosaic_0001>
module attributes {stable_mosaic.version = 11 : i64} {
  func.func @attention_gate_kernel(%arg0: i32, %arg1: i32, %arg2: memref<1x8x8x8xbf16, #tpu.memory_space<vmem>>, %arg3: memref<1x1x8x8xbf16, #tpu.memory_space<vmem>>, %arg4: memref<1x1x8x8xbf16, #tpu.memory_space<vmem>>, %arg5: memref<1x16x8x16xbf16, #tpu.memory_space<vmem>>, %arg6: memref<1x1x8x16xbf16, #tpu.memory_space<vmem>>, %arg7: memref<3x24x8xbf16, #tpu.memory_space<vmem>>, %arg8: memref<3x24x8xbf16, #tpu.memory_space<vmem>>, %arg9: memref<1x8xf32, #tpu.memory_space<vmem>>, %arg10: memref<1x8xf32, #tpu.memory_space<vmem>>, %arg11: memref<1x8xf32, #tpu.memory_space<vmem>>, %arg12: memref<1x1xf32, #tpu.memory_space<vmem>>, %arg13: memref<1x16x8x16xbf16, #tpu.memory_space<vmem>>) attributes {dimension_semantics = [#tpu.dimension_semantics<parallel>, #tpu.dimension_semantics<parallel>], iteration_bounds = array<i64: 2, 1>, scalar_prefetch = 0 : i64, scratch_operands = 0 : i64, tpu.core_type = #tpu.core_type<tc>, window_params = [{transform_indices = @transform_0, window_bounds = array<i64: 1, 8, 8, 8>}, {transform_indices = @transform_1, window_bounds = array<i64: 1, 1, 8, 8>}, {transform_indices = @transform_2, window_bounds = array<i64: 1, 1, 8, 8>}, {transform_indices = @transform_3, window_bounds = array<i64: 1, 16, 8, 16>}, {transform_indices = @transform_4, window_bounds = array<i64: 1, 1, 8, 16>}, {pipeline_mode = #tpu.pipeline_mode<synchronous>, transform_indices = @transform_5, window_bounds = array<i64: 3, 24, 8>}, {pipeline_mode = #tpu.pipeline_mode<synchronous>, transform_indices = @transform_6, window_bounds = array<i64: 3, 24, 8>}, {pipeline_mode = #tpu.pipeline_mode<synchronous>, transform_indices = @transform_7, window_bounds = array<i64: 1, 8>}, {pipeline_mode = #tpu.pipeline_mode<synchronous>, transform_indices = @transform_8, window_bounds = array<i64: 1, 8>}, {pipeline_mode = #tpu.pipeline_mode<synchronous>, transform_indices = @transform_9, window_bounds = array<i64: 1, 8>}, {pipeline_mode = #tpu.pipeline_mode<synchronous>, transform_indices = @transform_10, window_bounds = array<i64: 1, 1>}, {transform_indices = @transform_11, window_bounds = array<i64: 1, 16, 8, 16>}]} {
    %c0 = arith.constant 0 : index
    %c0_0 = arith.constant 0 : index
    %c0_1 = arith.constant 0 : index
    %c0_2 = arith.constant 0 : index
    %0 = vector.load %arg3[%c0, %c0_0, %c0_1, %c0_2] : memref<1x1x8x8xbf16, #tpu.memory_space<vmem>>, vector<1x1x8x8xbf16>
    %1 = vector.shape_cast %0 : vector<1x1x8x8xbf16> to vector<1x8x8xbf16>
    %c0_i32 = arith.constant 0 : i32
    %2 = arith.cmpi eq, %arg1, %c0_i32 : i32
    %cst = arith.constant 0.000000e+00 : bf16
    %3 = vector.broadcast %cst : bf16 to vector<1x8x8xbf16>
    %4 = arith.select %2, %3, %1 : vector<1x8x8xbf16>
    %c0_3 = arith.constant 0 : index
    %c0_4 = arith.constant 0 : index
    %c0_5 = arith.constant 0 : index
    %c0_6 = arith.constant 0 : index
    %5 = vector.load %arg4[%c0_3, %c0_4, %c0_5, %c0_6] : memref<1x1x8x8xbf16, #tpu.memory_space<vmem>>, vector<1x1x8x8xbf16>
    %6 = vector.shape_cast %5 : vector<1x1x8x8xbf16> to vector<1x8x8xbf16>
    %c0_i32_7 = arith.constant 0 : i32
    %7 = arith.cmpi eq, %arg1, %c0_i32_7 : i32
    %cst_8 = arith.constant 0.000000e+00 : bf16
    %8 = vector.broadcast %cst_8 : bf16 to vector<1x8x8xbf16>
    %9 = arith.select %7, %8, %6 : vector<1x8x8xbf16>
    %c0_9 = arith.constant 0 : index
    %c0_10 = arith.constant 0 : index
    %c0_11 = arith.constant 0 : index
    %c0_12 = arith.constant 0 : index
    %10 = vector.load %arg6[%c0_9, %c0_10, %c0_11, %c0_12] : memref<1x1x8x16xbf16, #tpu.memory_space<vmem>>, vector<1x1x8x16xbf16>
    %11 = vector.shape_cast %10 : vector<1x1x8x16xbf16> to vector<1x8x16xbf16>
    %c0_i32_13 = arith.constant 0 : i32
    %12 = arith.cmpi eq, %arg1, %c0_i32_13 : i32
    %cst_14 = arith.constant 0.000000e+00 : bf16
    %13 = vector.broadcast %cst_14 : bf16 to vector<1x8x16xbf16>
    %14 = arith.select %12, %13, %11 : vector<1x8x16xbf16>
    %c0_15 = arith.constant 0 : index
    %c0_16 = arith.constant 0 : index
    %c0_17 = arith.constant 0 : index
    %c0_18 = arith.constant 0 : index
    %15 = vector.load %arg2[%c0_15, %c0_16, %c0_17, %c0_18] : memref<1x8x8x8xbf16, #tpu.memory_space<vmem>>, vector<1x8x8x8xbf16>
    %16 = vector.shape_cast %15 : vector<1x8x8x8xbf16> to vector<8x8x8xbf16>
    %17 = tpu.concatenate %4, %16, %9 in 0 : vector<1x8x8xbf16>, vector<8x8x8xbf16>, vector<1x8x8xbf16> -> vector<10x8x8xbf16>
    %18 = vector.extract_strided_slice %17 {offsets = [0, 0, 0], sizes = [8, 8, 8], strides = [1, 1, 1]} : vector<10x8x8xbf16> to vector<8x8x8xbf16>
    %19 = vector.extract_strided_slice %17 {offsets = [1, 0, 0], sizes = [8, 8, 8], strides = [1, 1, 1]} : vector<10x8x8xbf16> to vector<8x8x8xbf16>
    %20 = vector.extract_strided_slice %17 {offsets = [2, 0, 0], sizes = [8, 8, 8], strides = [1, 1, 1]} : vector<10x8x8xbf16> to vector<8x8x8xbf16>
    %21 = tpu.concatenate %18, %19, %20 in 2 : vector<8x8x8xbf16>, vector<8x8x8xbf16>, vector<8x8x8xbf16> -> vector<8x8x24xbf16>
    %cst_19 = arith.constant 0.000000e+00 : bf16
    %22 = vector.broadcast %cst_19 : bf16 to vector<8x1x24xbf16>
    %23 = vector.extract_strided_slice %21 {offsets = [0, 0, 0], sizes = [8, 7, 24], strides = [1, 1, 1]} : vector<8x8x24xbf16> to vector<8x7x24xbf16>
    %24 = tpu.concatenate %22, %23 in 1 : vector<8x1x24xbf16>, vector<8x7x24xbf16> -> vector<8x8x24xbf16>
    %25 = vector.extract_strided_slice %21 {offsets = [0, 1, 0], sizes = [8, 7, 24], strides = [1, 1, 1]} : vector<8x8x24xbf16> to vector<8x7x24xbf16>
    %26 = tpu.concatenate %25, %22 in 1 : vector<8x7x24xbf16>, vector<8x1x24xbf16> -> vector<8x8x24xbf16>
    %c0_20 = arith.constant 0 : index
    %c0_21 = arith.constant 0 : index
    %27 = vector.load %arg9[%c0_20, %c0_21] : memref<1x8xf32, #tpu.memory_space<vmem>>, vector<1x8xf32>
    %28 = vector.shape_cast %24 : vector<8x8x24xbf16> to vector<64x24xbf16>
    %c0_22 = arith.constant 0 : index
    %c0_23 = arith.constant 0 : index
    %c0_24 = arith.constant 0 : index
    %29 = vector.load %arg7[%c0_22, %c0_23, %c0_24] : memref<3x24x8xbf16, #tpu.memory_space<vmem>>, vector<1x24x8xbf16>
    %30 = vector.shape_cast %29 : vector<1x24x8xbf16> to vector<24x8xbf16>
    %cst_25 = arith.constant dense<0.000000e+00> : vector<64x8xf32>
    %31 = tpu.matmul %28, %30, %cst_25 {dimension_numbers = #tpu.dot_dimension_numbers<[1], [0], [0], [1], [0, 0, 1, 1], [], []>} : vector<64x24xbf16>, vector<24x8xbf16>, vector<64x8xf32> -> vector<64x8xf32>
    %32 = vector.broadcast %27 : vector<1x8xf32> to vector<64x8xf32>
    %33 = arith.addf %32, %31 : vector<64x8xf32>
    %34 = vector.shape_cast %21 : vector<8x8x24xbf16> to vector<64x24xbf16>
    %c1 = arith.constant 1 : index
    %c0_26 = arith.constant 0 : index
    %c0_27 = arith.constant 0 : index
    %35 = vector.load %arg7[%c1, %c0_26, %c0_27] : memref<3x24x8xbf16, #tpu.memory_space<vmem>>, vector<1x24x8xbf16>
    %36 = vector.shape_cast %35 : vector<1x24x8xbf16> to vector<24x8xbf16>
    %cst_28 = arith.constant dense<0.000000e+00> : vector<64x8xf32>
    %37 = tpu.matmul %34, %36, %cst_28 {dimension_numbers = #tpu.dot_dimension_numbers<[1], [0], [0], [1], [0, 0, 1, 1], [], []>} : vector<64x24xbf16>, vector<24x8xbf16>, vector<64x8xf32> -> vector<64x8xf32>
    %38 = arith.addf %33, %37 : vector<64x8xf32>
    %39 = vector.shape_cast %26 : vector<8x8x24xbf16> to vector<64x24xbf16>
    %c2 = arith.constant 2 : index
    %c0_29 = arith.constant 0 : index
    %c0_30 = arith.constant 0 : index
    %40 = vector.load %arg7[%c2, %c0_29, %c0_30] : memref<3x24x8xbf16, #tpu.memory_space<vmem>>, vector<1x24x8xbf16>
    %41 = vector.shape_cast %40 : vector<1x24x8xbf16> to vector<24x8xbf16>
    %cst_31 = arith.constant dense<0.000000e+00> : vector<64x8xf32>
    %42 = tpu.matmul %39, %41, %cst_31 {dimension_numbers = #tpu.dot_dimension_numbers<[1], [0], [0], [1], [0, 0, 1, 1], [], []>} : vector<64x24xbf16>, vector<24x8xbf16>, vector<64x8xf32> -> vector<64x8xf32>
    %43 = arith.addf %38, %42 : vector<64x8xf32>
    %c0_32 = arith.constant 0 : index
    %c0_33 = arith.constant 0 : index
    %c0_34 = arith.constant 0 : index
    %c0_35 = arith.constant 0 : index
    %44 = vector.load %arg5[%c0_32, %c0_33, %c0_34, %c0_35] : memref<1x16x8x16xbf16, #tpu.memory_space<vmem>>, vector<1x16x8x16xbf16>
    %45 = vector.shape_cast %44 : vector<1x16x8x16xbf16> to vector<16x8x16xbf16>
    %46 = vector.shape_cast %45 : vector<16x8x16xbf16> to vector<8x2x8x16xbf16>
    %47 = vector.extract_strided_slice %46 {offsets = [0, 0, 0, 0], sizes = [8, 1, 8, 16], strides = [1, 1, 1, 1]} : vector<8x2x8x16xbf16> to vector<8x1x8x16xbf16>
    %48 = vector.shape_cast %47 : vector<8x1x8x16xbf16> to vector<8x8x16xbf16>
    %49 = vector.extract_strided_slice %46 {offsets = [0, 1, 0, 0], sizes = [8, 1, 8, 16], strides = [1, 1, 1, 1]} : vector<8x2x8x16xbf16> to vector<8x1x8x16xbf16>
    %50 = vector.shape_cast %49 : vector<8x1x8x16xbf16> to vector<8x8x16xbf16>
    %51 = vector.extract_strided_slice %50 {offsets = [0, 0, 0], sizes = [7, 8, 16], strides = [1, 1, 1]} : vector<8x8x16xbf16> to vector<7x8x16xbf16>
    %52 = tpu.concatenate %14, %51 in 0 : vector<1x8x16xbf16>, vector<7x8x16xbf16> -> vector<8x8x16xbf16>
    %cst_36 = arith.constant 0.000000e+00 : bf16
    %53 = vector.broadcast %cst_36 : bf16 to vector<16x1x8xbf16>
    %54 = vector.extract_strided_slice %45 {offsets = [0, 0, 8], sizes = [16, 7, 8], strides = [1, 1, 1]} : vector<16x8x16xbf16> to vector<16x7x8xbf16>
    %55 = tpu.concatenate %53, %54 in 1 : vector<16x1x8xbf16>, vector<16x7x8xbf16> -> vector<16x8x8xbf16>
    %56 = vector.shape_cast %55 : vector<16x8x8xbf16> to vector<8x2x8x8xbf16>
    %57 = vector.extract_strided_slice %56 {offsets = [0, 0, 0, 0], sizes = [8, 1, 8, 8], strides = [1, 1, 1, 1]} : vector<8x2x8x8xbf16> to vector<8x1x8x8xbf16>
    %58 = vector.shape_cast %57 : vector<8x1x8x8xbf16> to vector<8x8x8xbf16>
    %59 = vector.extract_strided_slice %56 {offsets = [0, 1, 0, 0], sizes = [8, 1, 8, 8], strides = [1, 1, 1, 1]} : vector<8x2x8x8xbf16> to vector<8x1x8x8xbf16>
    %60 = vector.shape_cast %59 : vector<8x1x8x8xbf16> to vector<8x8x8xbf16>
    %cst_37 = arith.constant 0.000000e+00 : bf16
    %61 = vector.broadcast %cst_37 : bf16 to vector<1x1x8xbf16>
    %62 = vector.extract_strided_slice %14 {offsets = [0, 0, 8], sizes = [1, 7, 8], strides = [1, 1, 1]} : vector<1x8x16xbf16> to vector<1x7x8xbf16>
    %63 = tpu.concatenate %61, %62 in 1 : vector<1x1x8xbf16>, vector<1x7x8xbf16> -> vector<1x8x8xbf16>
    %64 = vector.extract_strided_slice %60 {offsets = [0, 0, 0], sizes = [7, 8, 8], strides = [1, 1, 1]} : vector<8x8x8xbf16> to vector<7x8x8xbf16>
    %65 = tpu.concatenate %63, %64 in 0 : vector<1x8x8xbf16>, vector<7x8x8xbf16> -> vector<8x8x8xbf16>
    %c0_38 = arith.constant 0 : index
    %c0_39 = arith.constant 0 : index
    %66 = vector.load %arg10[%c0_38, %c0_39] : memref<1x8xf32, #tpu.memory_space<vmem>>, vector<1x8xf32>
    %67 = tpu.concatenate %65, %52 in 2 : vector<8x8x8xbf16>, vector<8x8x16xbf16> -> vector<8x8x24xbf16>
    %68 = vector.shape_cast %67 : vector<8x8x24xbf16> to vector<64x24xbf16>
    %c0_40 = arith.constant 0 : index
    %c0_41 = arith.constant 0 : index
    %c0_42 = arith.constant 0 : index
    %69 = vector.load %arg8[%c0_40, %c0_41, %c0_42] : memref<3x24x8xbf16, #tpu.memory_space<vmem>>, vector<1x24x8xbf16>
    %70 = vector.shape_cast %69 : vector<1x24x8xbf16> to vector<24x8xbf16>
    %cst_43 = arith.constant dense<0.000000e+00> : vector<64x8xf32>
    %71 = tpu.matmul %68, %70, %cst_43 {dimension_numbers = #tpu.dot_dimension_numbers<[1], [0], [0], [1], [0, 0, 1, 1], [], []>} : vector<64x24xbf16>, vector<24x8xbf16>, vector<64x8xf32> -> vector<64x8xf32>
    %72 = vector.broadcast %66 : vector<1x8xf32> to vector<64x8xf32>
    %73 = arith.addf %72, %71 : vector<64x8xf32>
    %74 = tpu.concatenate %58, %48 in 2 : vector<8x8x8xbf16>, vector<8x8x16xbf16> -> vector<8x8x24xbf16>
    %75 = vector.shape_cast %74 : vector<8x8x24xbf16> to vector<64x24xbf16>
    %c1_44 = arith.constant 1 : index
    %c0_45 = arith.constant 0 : index
    %c0_46 = arith.constant 0 : index
    %76 = vector.load %arg8[%c1_44, %c0_45, %c0_46] : memref<3x24x8xbf16, #tpu.memory_space<vmem>>, vector<1x24x8xbf16>
    %77 = vector.shape_cast %76 : vector<1x24x8xbf16> to vector<24x8xbf16>
    %cst_47 = arith.constant dense<0.000000e+00> : vector<64x8xf32>
    %78 = tpu.matmul %75, %77, %cst_47 {dimension_numbers = #tpu.dot_dimension_numbers<[1], [0], [0], [1], [0, 0, 1, 1], [], []>} : vector<64x24xbf16>, vector<24x8xbf16>, vector<64x8xf32> -> vector<64x8xf32>
    %79 = arith.addf %73, %78 : vector<64x8xf32>
    %80 = tpu.concatenate %60, %50 in 2 : vector<8x8x8xbf16>, vector<8x8x16xbf16> -> vector<8x8x24xbf16>
    %81 = vector.shape_cast %80 : vector<8x8x24xbf16> to vector<64x24xbf16>
    %c2_48 = arith.constant 2 : index
    %c0_49 = arith.constant 0 : index
    %c0_50 = arith.constant 0 : index
    %82 = vector.load %arg8[%c2_48, %c0_49, %c0_50] : memref<3x24x8xbf16, #tpu.memory_space<vmem>>, vector<1x24x8xbf16>
    %83 = vector.shape_cast %82 : vector<1x24x8xbf16> to vector<24x8xbf16>
    %cst_51 = arith.constant dense<0.000000e+00> : vector<64x8xf32>
    %84 = tpu.matmul %81, %83, %cst_51 {dimension_numbers = #tpu.dot_dimension_numbers<[1], [0], [0], [1], [0, 0, 1, 1], [], []>} : vector<64x24xbf16>, vector<24x8xbf16>, vector<64x8xf32> -> vector<64x8xf32>
    %85 = arith.addf %79, %84 : vector<64x8xf32>
    %cst_52 = arith.constant 0.000000e+00 : f32
    %86 = vector.broadcast %cst_52 : f32 to vector<64x8xf32>
    %87 = arith.maximumf %43, %86 : vector<64x8xf32>
    %cst_53 = arith.constant 0.000000e+00 : f32
    %88 = vector.broadcast %cst_53 : f32 to vector<64x8xf32>
    %89 = arith.maximumf %85, %88 : vector<64x8xf32>
    %90 = arith.addf %87, %89 : vector<64x8xf32>
    %c0_54 = arith.constant 0 : index
    %c0_55 = arith.constant 0 : index
    %91 = vector.load %arg11[%c0_54, %c0_55] : memref<1x8xf32, #tpu.memory_space<vmem>>, vector<1x8xf32>
    %92 = vector.broadcast %91 : vector<1x8xf32> to vector<64x8xf32>
    %93 = arith.mulf %90, %92 : vector<64x8xf32>
    %cst_56 = arith.constant dense<0.000000e+00> : vector<64xf32>
    %94 = vector.multi_reduction <add>, %93, %cst_56 [1] : vector<64x8xf32> to vector<64xf32>
    %95 = vector.shape_cast %94 : vector<64xf32> to vector<64x1xf32>
    %c0_57 = arith.constant 0 : index
    %c0_58 = arith.constant 0 : index
    %96 = vector.load %arg12[%c0_57, %c0_58] : memref<1x1xf32, #tpu.memory_space<vmem>>, vector<1x1xf32>
    %97 = vector.broadcast %96 : vector<1x1xf32> to vector<64x1xf32>
    %98 = arith.addf %95, %97 : vector<64x1xf32>
    %99 = arith.negf %98 : vector<64x1xf32>
    %100 = math.exp %99 : vector<64x1xf32>
    %cst_59 = arith.constant 1.000000e+00 : f32
    %101 = vector.broadcast %cst_59 : f32 to vector<64x1xf32>
    %102 = arith.addf %101, %100 : vector<64x1xf32>
    %103 = arith.divf %101, %102 : vector<64x1xf32>
    %104 = vector.shape_cast %103 : vector<64x1xf32> to vector<8x8x1xf32>
    %105 = vector.shape_cast %104 : vector<8x8x1xf32> to vector<8x1x8x1xf32>
    %106 = vector.shape_cast %105 : vector<8x1x8x1xf32> to vector<8x1x8x1xf32>
    %107 = vector.broadcast %106 : vector<8x1x8x1xf32> to vector<8x2x8x1xf32>
    %108 = vector.shape_cast %107 : vector<8x2x8x1xf32> to vector<16x8x1xf32>
    %109 = arith.extf %45 : vector<16x8x16xbf16> to vector<16x8x16xf32>
    %110 = vector.broadcast %108 : vector<16x8x1xf32> to vector<16x8x16xf32>
    %111 = arith.mulf %110, %109 : vector<16x8x16xf32>
    %112 = arith.truncf %111 : vector<16x8x16xf32> to vector<16x8x16xbf16>
    %c0_60 = arith.constant 0 : index
    %c0_61 = arith.constant 0 : index
    %c0_62 = arith.constant 0 : index
    %c0_63 = arith.constant 0 : index
    %113 = vector.load %arg13[%c0_60, %c0_61, %c0_62, %c0_63] : memref<1x16x8x16xbf16, #tpu.memory_space<vmem>>, vector<1x16x8x16xbf16>
    %114 = vector.shape_cast %113 : vector<1x16x8x16xbf16> to vector<16x8x16xbf16>
    %115 = vector.shape_cast %112 : vector<16x8x16xbf16> to vector<1x16x8x16xbf16>
    tpu.vector_store %arg13[%c0_60, %c0_61, %c0_62, %c0_63], %115 {strides = array<i32>} : memref<1x16x8x16xbf16, #tpu.memory_space<vmem>>, vector<1x16x8x16xbf16>,
    return
  }
  func.func @transform_0(%arg0: i32, %arg1: i32) -> (i32, i32, i32, i32) {
    %c0_i32 = arith.constant 0 : i32
    %c0_i32_0 = arith.constant 0 : i32
    %c0_i32_1 = arith.constant 0 : i32
    return %arg0, %arg1, %c0_i32, %c0_i32_0 : i32, i32, i32, i32
  }
  func.func @transform_1(%arg0: i32, %arg1: i32) -> (i32, i32, i32, i32) {
    %c8_i32 = arith.constant 8 : i32
    %0 = arith.muli %arg1, %c8_i32 : i32
    %c1_i32 = arith.constant 1 : i32
    %1 = arith.subi %0, %c1_i32 : i32
    %c0_i32 = arith.constant 0 : i32
    %2 = arith.maxsi %1, %c0_i32 : i32
    %c0_i32_0 = arith.constant 0 : i32
    %c0_i32_1 = arith.constant 0 : i32
    %c0_i32_2 = arith.constant 0 : i32
    return %arg0, %2, %c0_i32_0, %c0_i32_1 : i32, i32, i32, i32
  }
  func.func @transform_2(%arg0: i32, %arg1: i32) -> (i32, i32, i32, i32) {
    %c8_i32 = arith.constant 8 : i32
    %0 = arith.muli %arg1, %c8_i32 : i32
    %c8_i32_0 = arith.constant 8 : i32
    %1 = arith.addi %0, %c8_i32_0 : i32
    %c7_i32 = arith.constant 7 : i32
    %2 = arith.minsi %1, %c7_i32 : i32
    %c0_i32 = arith.constant 0 : i32
    %c0_i32_1 = arith.constant 0 : i32
    %c0_i32_2 = arith.constant 0 : i32
    return %arg0, %2, %c0_i32, %c0_i32_1 : i32, i32, i32, i32
  }
  func.func @transform_3(%arg0: i32, %arg1: i32) -> (i32, i32, i32, i32) {
    %c0_i32 = arith.constant 0 : i32
    %c0_i32_0 = arith.constant 0 : i32
    %c0_i32_1 = arith.constant 0 : i32
    return %arg0, %arg1, %c0_i32, %c0_i32_0 : i32, i32, i32, i32
  }
  func.func @transform_4(%arg0: i32, %arg1: i32) -> (i32, i32, i32, i32) {
    %c2_i32 = arith.constant 2 : i32
    %0 = arith.muli %c2_i32, %arg1 : i32
    %c8_i32 = arith.constant 8 : i32
    %1 = arith.muli %0, %c8_i32 : i32
    %c1_i32 = arith.constant 1 : i32
    %2 = arith.subi %1, %c1_i32 : i32
    %c0_i32 = arith.constant 0 : i32
    %3 = arith.maxsi %2, %c0_i32 : i32
    %c0_i32_0 = arith.constant 0 : i32
    %c0_i32_1 = arith.constant 0 : i32
    %c0_i32_2 = arith.constant 0 : i32
    return %arg0, %3, %c0_i32_0, %c0_i32_1 : i32, i32, i32, i32
  }
  func.func @transform_5(%arg0: i32, %arg1: i32) -> (i32, i32, i32) {
    %c0_i32 = arith.constant 0 : i32
    %c0_i32_0 = arith.constant 0 : i32
    %c0_i32_1 = arith.constant 0 : i32
    %c0_i32_2 = arith.constant 0 : i32
    return %c0_i32, %c0_i32_0, %c0_i32_1 : i32, i32, i32
  }
  func.func @transform_6(%arg0: i32, %arg1: i32) -> (i32, i32, i32) {
    %c0_i32 = arith.constant 0 : i32
    %c0_i32_0 = arith.constant 0 : i32
    %c0_i32_1 = arith.constant 0 : i32
    %c0_i32_2 = arith.constant 0 : i32
    return %c0_i32, %c0_i32_0, %c0_i32_1 : i32, i32, i32
  }
  func.func @transform_7(%arg0: i32, %arg1: i32) -> (i32, i32) {
    %c0_i32 = arith.constant 0 : i32
    %c0_i32_0 = arith.constant 0 : i32
    %c0_i32_1 = arith.constant 0 : i32
    return %c0_i32, %c0_i32_0 : i32, i32
  }
  func.func @transform_8(%arg0: i32, %arg1: i32) -> (i32, i32) {
    %c0_i32 = arith.constant 0 : i32
    %c0_i32_0 = arith.constant 0 : i32
    %c0_i32_1 = arith.constant 0 : i32
    return %c0_i32, %c0_i32_0 : i32, i32
  }
  func.func @transform_9(%arg0: i32, %arg1: i32) -> (i32, i32) {
    %c0_i32 = arith.constant 0 : i32
    %c0_i32_0 = arith.constant 0 : i32
    %c0_i32_1 = arith.constant 0 : i32
    return %c0_i32, %c0_i32_0 : i32, i32
  }
  func.func @transform_10(%arg0: i32, %arg1: i32) -> (i32, i32) {
    %c0_i32 = arith.constant 0 : i32
    %c0_i32_0 = arith.constant 0 : i32
    %c0_i32_1 = arith.constant 0 : i32
    return %c0_i32, %c0_i32_0 : i32, i32
  }
  func.func @transform_11(%arg0: i32, %arg1: i32) -> (i32, i32, i32, i32) {
    %c0_i32 = arith.constant 0 : i32
    %c0_i32_0 = arith.constant 0 : i32
    %c0_i32_1 = arith.constant 0 : i32
    return %arg0, %arg1, %c0_i32, %c0_i32_0 : i32, i32, i32, i32
  }
}

</mosaic_0001>

<llo_original>
// kernel: attention_gate.1
$region0: #{attention_gate.1}
  #allocation0 [shape = 'u32[]', space=smem, size = 0x4, offset = 0x4, fixed_abs, tag = 'smem constant byte address 0x4 - core index']
  #allocation1 [shape = 'u32[144,128]{1,0:T(1,128)}', space=vmem, size = 0x12000, scoped, tag = 'internal scratch']
  #allocation2 [shape = 'f32[1,1]{1,0:T(1,128)S(1)}', space=vmem, size = 0x200, scoped, tag = 'scoped memory for attention_gate.1']
  %s0 = inlined_call_operand.vmem [shape: bf16[2,8,8,8], index: 0, kind: input, shape index: {}, may-alias: {0,1,2}]
  %s1 = inlined_call_operand.vmem [shape: bf16[2,8,8,8], index: 1, kind: input, shape index: {}, may-alias: {0,1,2}]
  %s2 = inlined_call_operand.vmem [shape: bf16[2,8,8,8], index: 2, kind: input, shape index: {}, may-alias: {0,1,2}]
  %s3 = inlined_call_operand.vmem [shape: bf16[2,16,8,16], index: 3, kind: input, shape index: {}, may-alias: {3,4}]
  %s4 = inlined_call_operand.vmem [shape: bf16[2,16,8,16], index: 4, kind: input, shape index: {}, may-alias: {3,4}]
  %s5 = inlined_call_operand.vmem [shape: bf16[3,24,8], index: 5, kind: input, shape index: {}]
  %s6 = inlined_call_operand.vmem [shape: bf16[3,24,8], index: 6, kind: input, shape index: {}]
  %s7 = inlined_call_operand.vmem [shape: f32[1,8], index: 7, kind: input, shape index: {}]
  %s8 = inlined_call_operand.vmem [shape: f32[1,8], index: 8, kind: input, shape index: {}]
  %s9 = inlined_call_operand.vmem [shape: f32[1,8], index: 9, kind: input, shape index: {}]
  %s10 = inlined_call_operand.<no memory space> [shape: f32[1,1], index: 10, kind: input, shape index: {}]
  %s11 = inlined_call_operand.vmem [shape: bf16[2,16,8,16], index: 11, kind: output, shape index: {}]
  %s12 = sld [smem:[#allocation0]]
  $region77: #{attention_gate.1} parent=0
    _
  %s14 = ssub.s32 1, %s12
  %s15 = scalar_select 0, %s14, %s12
  %v16 = vstv %s10
  %17 = vst [vmem:[#allocation2] sm:$0x1] %v16
  loop: start=0, step=1, limit=4
  $region2: #{attention_gate.1} parent=0 // loop_pre_header
    _
  $region3: #{attention_gate.1} parent=0 // loop_header
    %s19 = sphi 0, %s23
    %p20 = scmp.ge.s32.totalorder %s19, 4
    %s26 = sphi 0, %s38
    %s27 = sphi 0, %s34
    %s28 = sphi 0, %s26
    %s29 = sphi 0, %s27
    %s30 = sphi 0, %s28
    %s31 = sphi 0, %s29
    %s43 = sphi 0, %s45
    %s46 = sphi 0, %s43
    %s47 = sphi 0, %s46
    %s63 = sphi 0, %s47
    %s79 = sphi 0, %s81
    %s82 = sphi 0, %s79
    %s83 = sphi 0, %s82
    %s99 = sphi 0, %s83
    %s115 = sphi 0, %s117
    %s118 = sphi 0, %s115
    %s119 = sphi 0, %s118
    %s135 = sphi 0, %s119
    %s143 = sphi 0, %s145
    %s146 = sphi 0, %s143
    %s147 = sphi 0, %s146
    %s163 = sphi 0, %s147
    %s179 = sphi 0, %s181
    %s182 = sphi 0, %s179
    %s183 = sphi 0, %s182
    %s199 = sphi 0, %s183
    %s203 = sphi 0, %s203
    %s205 = sphi 0, %s203
    %s206 = sphi 0, %s205
    %s220 = sphi 0, %s206
    %s224 = sphi 0, %s224
    %s226 = sphi 0, %s224
    %s227 = sphi 0, %s226
    %s241 = sphi 0, %s227
    %s245 = sphi 0, %s245
    %s247 = sphi 0, %s245
    %s248 = sphi 0, %s247
    %s262 = sphi 0, %s248
    %s266 = sphi 0, %s266
    %s268 = sphi 0, %s266
    %s269 = sphi 0, %s268
    %s283 = sphi 0, %s269
    %s287 = sphi 0, %s287
    %s289 = sphi 0, %s287
    %s290 = sphi 0, %s289
    %s304 = sphi 0, %s290
    %s308 = sphi 0, %s308
    %s310 = sphi 0, %s308
    %s311 = sphi 0, %s310
    %s325 = sphi 0, %s311
    %s333 = sphi 0, %s335
    %s336 = sphi 0, %s333
    %s337 = sphi 0, %s336
    %s353 = sphi 0, %s337
  $region4: #{attention_gate.1} parent=0 // loop_header_branch
    %22 = sbr.rel (%p20) target = $region8
  $region5: #{attention_gate.1} parent=0 // loop_body
    %s24 = ssub.s32 %s19, 1
    %s25 = ssub.s32 %s19, 2
    %s32 = sadd.s32 1, %s27
    %p33 = scmp.ge.s32.totalorder %s32, 1
    %s34 = scalar_select %p33, 0, %s32
    %s35 = sadd.s32 1, %s26
    %s36 = scalar_select %p33, %s35, %s26
    %p37 = scmp.ge.s32.totalorder %s36, 2
    %s38 = scalar_select %p37, 0, %s36
    %s39 = ssub.s32 %s26, %s38
    %s40 = ssub.s32 %s27, %s34
    %s41 = sor.u32 %s39, %s40
    %p42 = scmp.eq.s32.totalorder %s41, 0
    %s44 = sadd.s32 %s43, 1
    %s45 = scalar_select %p42, %s43, %s44
    %p48 = pneg %p42
    %p49 = scmp.eq.s32.totalorder %s19, 1
    %p50 = por %p48, %p49
    %p51 = scmp.ne.s32.totalorder %s43, %s46
    %p52 = scmp.eq.s32.totalorder %s19, 0
    %p53 = por %p51, %p52
    %p54 = scmp.ne.s32.totalorder %s43, %s46
    %p55 = scmp.eq.s32.totalorder %s24, 1
    %p56 = por %p54, %p55
    %p57 = scmp.ne.s32.totalorder %s46, %s47
    %p58 = scmp.eq.s32.totalorder %s24, 0
    %p59 = por %p57, %p58
    %p60 = scmp.ne.s32.totalorder %s46, %s47
    %p61 = scmp.eq.s32.totalorder %s25, 1
    %p62 = por %p60, %p61
    %p64 = scmp.ne.s32.totalorder %s47, %s63
    %p65 = scmp.eq.s32.totalorder %s25, 0
    %p66 = por %p64, %p65
    %s67 = smul.u32 %s27, 8
    %s68 = ssub.s32 %s67, 1
    %p69 = scmp.gt.s32.totalorder %s68, 0
    %s70 = scalar_select %p69, %s68, 0
    %s71 = smul.u32 %s34, 8
    %s72 = ssub.s32 %s71, 1
    %p73 = scmp.gt.s32.totalorder %s72, 0
    %s74 = scalar_select %p73, %s72, 0
    %s75 = ssub.s32 %s26, %s38
    %s76 = ssub.s32 %s70, %s74
    %s77 = sor.u32 %s75, %s76
    %p78 = scmp.eq.s32.totalorder %s77, 0
    %s80 = sadd.s32 %s79, 1
    %s81 = scalar_select %p78, %s79, %s80
    %p84 = pneg %p78
    %p85 = scmp.eq.s32.totalorder %s19, 1
    %p86 = por %p84, %p85
    %p87 = scmp.ne.s32.totalorder %s79, %s82
    %p88 = scmp.eq.s32.totalorder %s19, 0
    %p89 = por %p87, %p88
    %p90 = scmp.ne.s32.totalorder %s79, %s82
    %p91 = scmp.eq.s32.totalorder %s24, 1
    %p92 = por %p90, %p91
    %p93 = scmp.ne.s32.totalorder %s82, %s83
    %p94 = scmp.eq.s32.totalorder %s24, 0
    %p95 = por %p93, %p94
    %p96 = scmp.ne.s32.totalorder %s82, %s83
    %p97 = scmp.eq.s32.totalorder %s25, 1
    %p98 = por %p96, %p97
    %p100 = scmp.ne.s32.totalorder %s83, %s99
    %p101 = scmp.eq.s32.totalorder %s25, 0
    %p102 = por %p100, %p101
    %s103 = smul.u32 %s27, 8
    %s104 = sadd.s32 %s103, 8
    %p105 = scmp.lt.s32.totalorder %s104, 7
    %s106 = scalar_select %p105, %s104, 7
    %s107 = smul.u32 %s34, 8
    %s108 = sadd.s32 %s107, 8
    %p109 = scmp.lt.s32.totalorder %s108, 7
    %s110 = scalar_select %p109, %s108, 7
    %s111 = ssub.s32 %s26, %s38
    %s112 = ssub.s32 %s106, %s110
    %s113 = sor.u32 %s111, %s112
    %p114 = scmp.eq.s32.totalorder %s113, 0
    %s116 = sadd.s32 %s115, 1
    %s117 = scalar_select %p114, %s115, %s116
    %p120 = pneg %p114
    %p121 = scmp.eq.s32.totalorder %s19, 1
    %p122 = por %p120, %p121
    %p123 = scmp.ne.s32.totalorder %s115, %s118
    %p124 = scmp.eq.s32.totalorder %s19, 0
    %p125 = por %p123, %p124
    %p126 = scmp.ne.s32.totalorder %s115, %s118
    %p127 = scmp.eq.s32.totalorder %s24, 1
    %p128 = por %p126, %p127
    %p129 = scmp.ne.s32.totalorder %s118, %s119
    %p130 = scmp.eq.s32.totalorder %s24, 0
    %p131 = por %p129, %p130
    %p132 = scmp.ne.s32.totalorder %s118, %s119
    %p133 = scmp.eq.s32.totalorder %s25, 1
    %p134 = por %p132, %p133
    %p136 = scmp.ne.s32.totalorder %s119, %s135
    %p137 = scmp.eq.s32.totalorder %s25, 0
    %p138 = por %p136, %p137
    %s139 = ssub.s32 %s26, %s38
    %s140 = ssub.s32 %s27, %s34
    %s141 = sor.u32 %s139, %s140
    %p142 = scmp.eq.s32.totalorder %s141, 0
    %s144 = sadd.s32 %s143, 1
    %s145 = scalar_select %p142, %s143, %s144
    %p148 = pneg %p142
    %p149 = scmp.eq.s32.totalorder %s19, 1
    %p150 = por %p148, %p149
    %p151 = scmp.ne.s32.totalorder %s143, %s146
    %p152 = scmp.eq.s32.totalorder %s19, 0
    %p153 = por %p151, %p152
    %p154 = scmp.ne.s32.totalorder %s143, %s146
    %p155 = scmp.eq.s32.totalorder %s24, 1
    %p156 = por %p154, %p155
    %p157 = scmp.ne.s32.totalorder %s146, %s147
    %p158 = scmp.eq.s32.totalorder %s24, 0
    %p159 = por %p157, %p158
    %p160 = scmp.ne.s32.totalorder %s146, %s147
    %p161 = scmp.eq.s32.totalorder %s25, 1
    %p162 = por %p160, %p161
    %p164 = scmp.ne.s32.totalorder %s147, %s163
    %p165 = scmp.eq.s32.totalorder %s25, 0
    %p166 = por %p164, %p165
    %s167 = smul.u32 %s27, 16
    %s168 = ssub.s32 %s167, 1
    %p169 = scmp.gt.s32.totalorder %s168, 0
    %s170 = scalar_select %p169, %s168, 0
    %s171 = smul.u32 %s34, 16
    %s172 = ssub.s32 %s171, 1
    %p173 = scmp.gt.s32.totalorder %s172, 0
    %s174 = scalar_select %p173, %s172, 0
    %s175 = ssub.s32 %s26, %s38
    %s176 = ssub.s32 %s170, %s174
    %s177 = sor.u32 %s175, %s176
    %p178 = scmp.eq.s32.totalorder %s177, 0
    %s180 = sadd.s32 %s179, 1
    %s181 = scalar_select %p178, %s179, %s180
    %p184 = pneg %p178
    %p185 = scmp.eq.s32.totalorder %s19, 1
    %p186 = por %p184, %p185
    %p187 = scmp.ne.s32.totalorder %s179, %s182
    %p188 = scmp.eq.s32.totalorder %s19, 0
    %p189 = por %p187, %p188
    %p190 = scmp.ne.s32.totalorder %s179, %s182
    %p191 = scmp.eq.s32.totalorder %s24, 1
    %p192 = por %p190, %p191
    %p193 = scmp.ne.s32.totalorder %s182, %s183
    %p194 = scmp.eq.s32.totalorder %s24, 0
    %p195 = por %p193, %p194
    %p196 = scmp.ne.s32.totalorder %s182, %s183
    %p197 = scmp.eq.s32.totalorder %s25, 1
    %p198 = por %p196, %p197
    %p200 = scmp.ne.s32.totalorder %s183, %s199
    %p201 = scmp.eq.s32.totalorder %s25, 0
    %p202 = por %p200, %p201
    %s204 = sadd.s32 %s203, 1
    %p207 = scmp.eq.s32.totalorder %s19, 1
    %p208 = scmp.ne.s32.totalorder %s203, %s205
    %p209 = scmp.eq.s32.totalorder %s19, 0
    %p210 = por %p208, %p209
    %p211 = scmp.ne.s32.totalorder %s203, %s205
    %p212 = scmp.eq.s32.totalorder %s24, 1
    %p213 = por %p211, %p212
    %p214 = scmp.ne.s32.totalorder %s205, %s206
    %p215 = scmp.eq.s32.totalorder %s24, 0
    %p216 = por %p214, %p215
    %p217 = scmp.ne.s32.totalorder %s205, %s206
    %p218 = scmp.eq.s32.totalorder %s25, 1
    %p219 = por %p217, %p218
    %p221 = scmp.ne.s32.totalorder %s206, %s220
    %p222 = scmp.eq.s32.totalorder %s25, 0
    %p223 = por %p221, %p222
    %s225 = sadd.s32 %s224, 1
    %p228 = scmp.eq.s32.totalorder %s19, 1
    %p229 = scmp.ne.s32.totalorder %s224, %s226
    %p230 = scmp.eq.s32.totalorder %s19, 0
    %p231 = por %p229, %p230
    %p232 = scmp.ne.s32.totalorder %s224, %s226
    %p233 = scmp.eq.s32.totalorder %s24, 1
    %p234 = por %p232, %p233
    %p235 = scmp.ne.s32.totalorder %s226, %s227
    %p236 = scmp.eq.s32.totalorder %s24, 0
    %p237 = por %p235, %p236
    %p238 = scmp.ne.s32.totalorder %s226, %s227
    %p239 = scmp.eq.s32.totalorder %s25, 1
    %p240 = por %p238, %p239
    %p242 = scmp.ne.s32.totalorder %s227, %s241
    %p243 = scmp.eq.s32.totalorder %s25, 0
    %p244 = por %p242, %p243
    %s246 = sadd.s32 %s245, 1
    %p249 = scmp.eq.s32.totalorder %s19, 1
    %p250 = scmp.ne.s32.totalorder %s245, %s247
    %p251 = scmp.eq.s32.totalorder %s19, 0
    %p252 = por %p250, %p251
    %p253 = scmp.ne.s32.totalorder %s245, %s247
    %p254 = scmp.eq.s32.totalorder %s24, 1
    %p255 = por %p253, %p254
    %p256 = scmp.ne.s32.totalorder %s247, %s248
    %p257 = scmp.eq.s32.totalorder %s24, 0
    %p258 = por %p256, %p257
    %p259 = scmp.ne.s32.totalorder %s247, %s248
    %p260 = scmp.eq.s32.totalorder %s25, 1
    %p261 = por %p259, %p260
    %p263 = scmp.ne.s32.totalorder %s248, %s262
    %p264 = scmp.eq.s32.totalorder %s25, 0
    %p265 = por %p263, %p264
    %s267 = sadd.s32 %s266, 1
    %p270 = scmp.eq.s32.totalorder %s19, 1
    %p271 = scmp.ne.s32.totalorder %s266, %s268
    %p272 = scmp.eq.s32.totalorder %s19, 0
    %p273 = por %p271, %p272
    %p274 = scmp.ne.s32.totalorder %s266, %s268
    %p275 = scmp.eq.s32.totalorder %s24, 1
    %p276 = por %p274, %p275
    %p277 = scmp.ne.s32.totalorder %s268, %s269
    %p278 = scmp.eq.s32.totalorder %s24, 0
    %p279 = por %p277, %p278
    %p280 = scmp.ne.s32.totalorder %s268, %s269
    %p281 = scmp.eq.s32.totalorder %s25, 1
    %p282 = por %p280, %p281
    %p284 = scmp.ne.s32.totalorder %s269, %s283
    %p285 = scmp.eq.s32.totalorder %s25, 0
    %p286 = por %p284, %p285
    %s288 = sadd.s32 %s287, 1
    %p291 = scmp.eq.s32.totalorder %s19, 1
    %p292 = scmp.ne.s32.totalorder %s287, %s289
    %p293 = scmp.eq.s32.totalorder %s19, 0
    %p294 = por %p292, %p293
    %p295 = scmp.ne.s32.totalorder %s287, %s289
    %p296 = scmp.eq.s32.totalorder %s24, 1
    %p297 = por %p295, %p296
    %p298 = scmp.ne.s32.totalorder %s289, %s290
    %p299 = scmp.eq.s32.totalorder %s24, 0
    %p300 = por %p298, %p299
    %p301 = scmp.ne.s32.totalorder %s289, %s290
    %p302 = scmp.eq.s32.totalorder %s25, 1
    %p303 = por %p301, %p302
    %p305 = scmp.ne.s32.totalorder %s290, %s304
    %p306 = scmp.eq.s32.totalorder %s25, 0
    %p307 = por %p305, %p306
    %s309 = sadd.s32 %s308, 1
    %p312 = scmp.eq.s32.totalorder %s19, 1
    %p313 = scmp.ne.s32.totalorder %s308, %s310
    %p314 = scmp.eq.s32.totalorder %s19, 0
    %p315 = por %p313, %p314
    %p316 = scmp.ne.s32.totalorder %s308, %s310
    %p317 = scmp.eq.s32.totalorder %s24, 1
    %p318 = por %p316, %p317
    %p319 = scmp.ne.s32.totalorder %s310, %s311
    %p320 = scmp.eq.s32.totalorder %s24, 0
    %p321 = por %p319, %p320
    %p322 = scmp.ne.s32.totalorder %s310, %s311
    %p323 = scmp.eq.s32.totalorder %s25, 1
    %p324 = por %p322, %p323
    %p326 = scmp.ne.s32.totalorder %s311, %s325
    %p327 = scmp.eq.s32.totalorder %s25, 0
    %p328 = por %p326, %p327
    %s329 = ssub.s32 %s26, %s38
    %s330 = ssub.s32 %s27, %s34
    %s331 = sor.u32 %s329, %s330
    %p332 = scmp.eq.s32.totalorder %s331, 0
    %s334 = sadd.s32 %s333, 1
    %s335 = scalar_select %p332, %s333, %s334
    %p338 = pneg %p332
    %p339 = scmp.eq.s32.totalorder %s19, 1
    %p340 = por %p338, %p339
    %p341 = scmp.ne.s32.totalorder %s333, %s336
    %p342 = scmp.eq.s32.totalorder %s19, 0
    %p343 = por %p341, %p342
    %p344 = scmp.ne.s32.totalorder %s333, %s336
    %p345 = scmp.eq.s32.totalorder %s24, 1
    %p346 = por %p344, %p345
    %p347 = scmp.ne.s32.totalorder %s336, %s337
    %p348 = scmp.eq.s32.totalorder %s24, 0
    %p349 = por %p347, %p348
    %p350 = scmp.ne.s32.totalorder %s336, %s337
    %p351 = scmp.eq.s32.totalorder %s25, 1
    %p352 = por %p350, %p351
    %p354 = scmp.ne.s32.totalorder %s337, %s353
    %p355 = scmp.eq.s32.totalorder %s25, 0
    %p356 = por %p354, %p355
    %p357 = scmp.le.s32.totalorder 1, %s19
    %p358 = scmp.lt.s32.totalorder %s19, 3
    %p359 = pnand %p357, %p358
    %p360 = pneg %p359
    // Predicated region
    $region9: #{attention_gate.1} parent=5 // pred_check
      _
    $region10: #{attention_gate.1} parent=5 // pred_check_branch
      %362 = sbr.rel (%p359) target = $region12
    $region11: #{attention_gate.1} parent=5 // pred_region
      %s363 = ssub.s32 %s19, 1
      // Predicated region
      $region13: #{attention_gate.1} parent=11 // pred_check
        %p364 = pneg %p216
      $region14: #{attention_gate.1} parent=11 // pred_check_branch
        %366 = sbr.rel (%p364) target = $region16
      $region15: #{attention_gate.1} parent=11 // pred_region
        _
      $region16: #{attention_gate.1} parent=11 // pred_fallthru
        _
      // Predicated region
      $region17: #{attention_gate.1} parent=11 // pred_check
        %p367 = pneg %p237
      $region18: #{attention_gate.1} parent=11 // pred_check_branch
        %369 = sbr.rel (%p367) target = $region20
      $region19: #{attention_gate.1} parent=11 // pred_region
        _
      $region20: #{attention_gate.1} parent=11 // pred_fallthru
        _
      // Predicated region
      $region21: #{attention_gate.1} parent=11 // pred_check
        %p370 = pneg %p258
      $region22: #{attention_gate.1} parent=11 // pred_check_branch
        %372 = sbr.rel (%p370) target = $region24
      $region23: #{attention_gate.1} parent=11 // pred_region
        _
      $region24: #{attention_gate.1} parent=11 // pred_fallthru
        _
      // Predicated region
      $region25: #{attention_gate.1} parent=11 // pred_check
        %p373 = pneg %p279
      $region26: #{attention_gate.1} parent=11 // pred_check_branch
        %375 = sbr.rel (%p373) target = $region28
      $region27: #{attention_gate.1} parent=11 // pred_region
        _
      $region28: #{attention_gate.1} parent=11 // pred_fallthru
        _
      // Predicated region
      $region29: #{attention_gate.1} parent=11 // pred_check
        %p376 = pneg %p300
      $region30: #{attention_gate.1} parent=11 // pred_check_branch
        %378 = sbr.rel (%p376) target = $region32
      $region31: #{attention_gate.1} parent=11 // pred_region
        _
      $region32: #{attention_gate.1} parent=11 // pred_fallthru
        _
      // Predicated region
      $region33: #{attention_gate.1} parent=11 // pred_check
        %p379 = pneg %p321
      $region34: #{attention_gate.1} parent=11 // pred_check_branch
        %381 = sbr.rel (%p379) target = $region36
      $region35: #{attention_gate.1} parent=11 // pred_region
        _
      $region36: #{attention_gate.1} parent=11 // pred_fallthru
        _
    $region12: #{attention_gate.1} parent=5 // pred_fallthru
      _
    %p382 = scmp.lt.s32.totalorder %s19, 2
    // Predicated region
    $region37: #{attention_gate.1} parent=5 // pred_check
      %p383 = pneg %p382
    $region38: #{attention_gate.1} parent=5 // pred_check_branch
      %385 = sbr.rel (%p383) target = $region40
    $region39: #{attention_gate.1} parent=5 // pred_region
      // Predicated region
      $region41: #{attention_gate.1} parent=39 // pred_check
        %p386 = pneg %p53
      $region42: #{attention_gate.1} parent=39 // pred_check_branch
        %388 = sbr.rel (%p386) target = $region44
      $region43: #{attention_gate.1} parent=39 // pred_region
        %s389 = smul.u32 8, %s27
        %p390 = scmp.lt.s32.totalorder %s26, 1
        %s391 = scalar_select %p390, %s26, 1
        %p392 = scmp.lt.s32.totalorder %s389, 7
        %s393 = scalar_select %p392, %s389, 7
        %s394 = smul.addr %s391, 8
        %s395 = sadd.s32 %s393, %s394
        %s396 = smul.addr %s395, 4
        %s397 = scalar_lea.vmem %s0, %s396
        %s398 = smul.u32 8, %s27
      $region44: #{attention_gate.1} parent=39 // pred_fallthru
        _
      // Predicated region
      $region45: #{attention_gate.1} parent=39 // pred_check
        %p399 = pneg %p89
      $region46: #{attention_gate.1} parent=39 // pred_check_branch
        %401 = sbr.rel (%p399) target = $region48
      $region47: #{attention_gate.1} parent=39 // pred_region
        %s402 = smul.u32 %s27, 8
        %s403 = ssub.s32 %s402, 1
        %p404 = scmp.gt.s32.totalorder %s403, 0
        %s405 = scalar_select %p404, %s403, 0
        %p406 = scmp.lt.s32.totalorder %s26, 1
        %s407 = scalar_select %p406, %s26, 1
        %p408 = scmp.lt.s32.totalorder %s405, 7
        %s409 = scalar_select %p408, %s405, 7
        %s410 = smul.addr %s407, 8
        %s411 = sadd.s32 %s409, %s410
        %s412 = smul.addr %s411, 4
        %s413 = scalar_lea.vmem %s1, %s412
        %s414 = smul.u32 %s27, 8
        %s415 = ssub.s32 %s414, 1
        %p416 = scmp.gt.s32.totalorder %s415, 0
        %s417 = scalar_select %p416, %s415, 0
      $region48: #{attention_gate.1} parent=39 // pred_fallthru
        _
      // Predicated region
      $region49: #{attention_gate.1} parent=39 // pred_check
        %p418 = pneg %p125
      $region50: #{attention_gate.1} parent=39 // pred_check_branch
        %420 = sbr.rel (%p418) target = $region52
      $region51: #{attention_gate.1} parent=39 // pred_region
        %s421 = smul.u32 %s27, 8
        %s422 = sadd.s32 %s421, 8
        %p423 = scmp.lt.s32.totalorder %s422, 7
        %s424 = scalar_select %p423, %s422, 7
        %p425 = scmp.lt.s32.totalorder %s26, 1
        %s426 = scalar_select %p425, %s26, 1
        %p427 = scmp.lt.s32.totalorder %s424, 7
        %s428 = scalar_select %p427, %s424, 7
        %s429 = smul.addr %s426, 8
        %s430 = sadd.s32 %s428, %s429
        %s431 = smul.addr %s430, 4
        %s432 = scalar_lea.vmem %s2, %s431
        %s433 = smul.u32 %s27, 8
        %s434 = sadd.s32 %s433, 8
        %p435 = scmp.lt.s32.totalorder %s434, 7
        %s436 = scalar_select %p435, %s434, 7
      $region52: #{attention_gate.1} parent=39 // pred_fallthru
        _
      // Predicated region
      $region53: #{attention_gate.1} parent=39 // pred_check
        %p437 = pneg %p153
      $region54: #{attention_gate.1} parent=39 // pred_check_branch
        %439 = sbr.rel (%p437) target = $region56
      $region55: #{attention_gate.1} parent=39 // pred_region
        %s440 = smul.u32 16, %s27
        %p441 = scmp.lt.s32.totalorder %s26, 1
        %s442 = scalar_select %p441, %s26, 1
        %p443 = scmp.lt.s32.totalorder %s440, 15
        %s444 = scalar_select %p443, %s440, 15
        %s445 = smul.addr %s442, 16
        %s446 = sadd.s32 %s444, %s445
        %s447 = smul.addr %s446, 4
        %s448 = scalar_lea.vmem %s3, %s447
        %s449 = smul.u32 16, %s27
      $region56: #{attention_gate.1} parent=39 // pred_fallthru
        _
      // Predicated region
      $region57: #{attention_gate.1} parent=39 // pred_check
        %p450 = pneg %p189
      $region58: #{attention_gate.1} parent=39 // pred_check_branch
        %452 = sbr.rel (%p450) target = $region60
      $region59: #{attention_gate.1} parent=39 // pred_region
        %s453 = smul.u32 %s27, 16
        %s454 = ssub.s32 %s453, 1
        %p455 = scmp.gt.s32.totalorder %s454, 0
        %s456 = scalar_select %p455, %s454, 0
        %p457 = scmp.lt.s32.totalorder %s26, 1
        %s458 = scalar_select %p457, %s26, 1
        %p459 = scmp.lt.s32.totalorder %s456, 15
        %s460 = scalar_select %p459, %s456, 15
        %s461 = smul.addr %s458, 16
        %s462 = sadd.s32 %s460, %s461
        %s463 = smul.addr %s462, 4
        %s464 = scalar_lea.vmem %s4, %s463
        %s465 = smul.u32 %s27, 16
        %s466 = ssub.s32 %s465, 1
        %p467 = scmp.gt.s32.totalorder %s466, 0
        %s468 = scalar_select %p467, %s466, 0
      $region60: #{attention_gate.1} parent=39 // pred_fallthru
        _
    $region40: #{attention_gate.1} parent=5 // pred_fallthru
      _
    %p469 = scmp.le.s32.totalorder 1, %s19
    %p470 = scmp.lt.s32.totalorder %s19, 3
    %p471 = pnand %p469, %p470
    %p472 = pneg %p471
    // Predicated region
    $region61: #{attention_gate.1} parent=5 // pred_check
      _
    $region62: #{attention_gate.1} parent=5 // pred_check_branch
      %474 = sbr.rel (%p471) target = $region64
    $region63: #{attention_gate.1} parent=5 // pred_region
      %s475 = ssub.s32 %s19, 1
      %s476 = smul.u32 8, %s29
      %p477 = scmp.lt.s32.totalorder %s28, 1
      %s478 = scalar_select %p477, %s28, 1
      %p479 = scmp.lt.s32.totalorder %s476, 7
      %s480 = scalar_select %p479, %s476, 7
      %s481 = smul.addr %s478, 8
      %s482 = sadd.s32 %s480, %s481
      %s483 = smul.addr %s482, 4
      %s484 = scalar_lea.vmem %s0, %s483
      %p485 = pneg %p59
      %p486 = pneg %p56
      %s487 = smul.u32 %s29, 8
      %s488 = ssub.s32 %s487, 1
      %p489 = scmp.gt.s32.totalorder %s488, 0
      %s490 = scalar_select %p489, %s488, 0
      %p491 = scmp.lt.s32.totalorder %s28, 1
      %s492 = scalar_select %p491, %s28, 1
      %p493 = scmp.lt.s32.totalorder %s490, 7
      %s494 = scalar_select %p493, %s490, 7
      %s495 = smul.addr %s492, 8
      %s496 = sadd.s32 %s494, %s495
      %s497 = smul.addr %s496, 4
      %s498 = scalar_lea.vmem %s1, %s497
      %p499 = pneg %p95
      %p500 = pneg %p92
      %s501 = smul.u32 %s29, 8
      %s502 = sadd.s32 %s501, 8
      %p503 = scmp.lt.s32.totalorder %s502, 7
      %s504 = scalar_select %p503, %s502, 7
      %p505 = scmp.lt.s32.totalorder %s28, 1
      %s506 = scalar_select %p505, %s28, 1
      %p507 = scmp.lt.s32.totalorder %s504, 7
      %s508 = scalar_select %p507, %s504, 7
      %s509 = smul.addr %s506, 8
      %s510 = sadd.s32 %s508, %s509
      %s511 = smul.addr %s510, 4
      %s512 = scalar_lea.vmem %s2, %s511
      %p513 = pneg %p131
      %p514 = pneg %p128
      %s515 = smul.u32 16, %s29
      %p516 = scmp.lt.s32.totalorder %s28, 1
      %s517 = scalar_select %p516, %s28, 1
      %p518 = scmp.lt.s32.totalorder %s515, 15
      %s519 = scalar_select %p518, %s515, 15
      %s520 = smul.addr %s517, 16
      %s521 = sadd.s32 %s519, %s520
      %s522 = smul.addr %s521, 4
      %s523 = scalar_lea.vmem %s3, %s522
      %p524 = pneg %p159
      %p525 = pneg %p156
      %s526 = smul.u32 %s29, 16
      %s527 = ssub.s32 %s526, 1
      %p528 = scmp.gt.s32.totalorder %s527, 0
      %s529 = scalar_select %p528, %s527, 0
      %p530 = scmp.lt.s32.totalorder %s28, 1
      %s531 = scalar_select %p530, %s28, 1
      %p532 = scmp.lt.s32.totalorder %s529, 15
      %s533 = scalar_select %p532, %s529, 15
      %s534 = smul.addr %s531, 16
      %s535 = sadd.s32 %s533, %s534
      %s536 = smul.addr %s535, 4
      %s537 = scalar_lea.vmem %s4, %s536
      %p538 = pneg %p195
      %p539 = pneg %p192
      %p540 = pneg %p216
      %p541 = pneg %p213
      %p542 = pneg %p237
      %p543 = pneg %p234
      %p544 = pneg %p258
      %p545 = pneg %p255
      %p546 = pneg %p279
      %p547 = pneg %p276
      %p548 = pneg %p300
      %p549 = pneg %p297
      %p550 = pneg %p321
      %p551 = pneg %p318
      %p552 = pneg %p349
      %p553 = pneg %p346
      %s554 = smul.u32 16, %s29
      %p555 = scmp.lt.s32.totalorder %s28, 1
      %s556 = scalar_select %p555, %s28, 1
      %p557 = scmp.lt.s32.totalorder %s554, 15
      %s558 = scalar_select %p557, %s554, 15
      %s559 = smul.addr %s556, 16
      %s560 = sadd.s32 %s558, %s559
      %s561 = smul.addr %s560, 4
      %s562 = scalar_lea.vmem %s11, %s561
      %s563 = smul.u32 8, %s29
      %p564 = scmp.lt.s32.totalorder %s28, 1
      %s565 = scalar_select %p564, %s28, 1
      %p566 = scmp.lt.s32.totalorder %s563, 7
      %s567 = scalar_select %p566, %s563, 7
      %s568 = smul.addr %s565, 8
      %s569 = sadd.s32 %s567, %s568
      %s570 = smul.addr %s569, 4
      %s571 = scalar_lea.vmem %s0, %s570
      %s572 = smul.u32 8, %s29
      %s573 = smul.u32 %s29, 8
      %s574 = ssub.s32 %s573, 1
      %p575 = scmp.gt.s32.totalorder %s574, 0
      %s576 = scalar_select %p575, %s574, 0
      %p577 = scmp.lt.s32.totalorder %s28, 1
      %s578 = scalar_select %p577, %s28, 1
      %p579 = scmp.lt.s32.totalorder %s576, 7
      %s580 = scalar_select %p579, %s576, 7
      %s581 = smul.addr %s578, 8
      %s582 = sadd.s32 %s580, %s581
      %s583 = smul.addr %s582, 4
      %s584 = scalar_lea.vmem %s1, %s583
      %s585 = smul.u32 %s29, 8
      %s586 = ssub.s32 %s585, 1
      %p587 = scmp.gt.s32.totalorder %s586, 0
      %s588 = scalar_select %p587, %s586, 0
      %s589 = smul.u32 %s29, 8
      %s590 = sadd.s32 %s589, 8
      %p591 = scmp.lt.s32.totalorder %s590, 7
      %s592 = scalar_select %p591, %s590, 7
      %p593 = scmp.lt.s32.totalorder %s28, 1
      %s594 = scalar_select %p593, %s28, 1
      %p595 = scmp.lt.s32.totalorder %s592, 7
      %s596 = scalar_select %p595, %s592, 7
      %s597 = smul.addr %s594, 8
      %s598 = sadd.s32 %s596, %s597
      %s599 = smul.addr %s598, 4
      %s600 = scalar_lea.vmem %s2, %s599
      %s601 = smul.u32 %s29, 8
      %s602 = sadd.s32 %s601, 8
      %p603 = scmp.lt.s32.totalorder %s602, 7
      %s604 = scalar_select %p603, %s602, 7
      %s605 = smul.u32 16, %s29
      %p606 = scmp.lt.s32.totalorder %s28, 1
      %s607 = scalar_select %p606, %s28, 1
      %p608 = scmp.lt.s32.totalorder %s605, 15
      %s609 = scalar_select %p608, %s605, 15
      %s610 = smul.addr %s607, 16
      %s611 = sadd.s32 %s609, %s610
      %s612 = smul.addr %s611, 4
      %s613 = scalar_lea.vmem %s3, %s612
      %s614 = smul.u32 16, %s29
      %s615 = smul.u32 %s29, 16
      %s616 = ssub.s32 %s615, 1
      %p617 = scmp.gt.s32.totalorder %s616, 0
      %s618 = scalar_select %p617, %s616, 0
      %p619 = scmp.lt.s32.totalorder %s28, 1
      %s620 = scalar_select %p619, %s28, 1
      %p621 = scmp.lt.s32.totalorder %s618, 15
      %s622 = scalar_select %p621, %s618, 15
      %s623 = smul.addr %s620, 16
      %s624 = sadd.s32 %s622, %s623
      %s625 = smul.addr %s624, 4
      %s626 = scalar_lea.vmem %s4, %s625
      %s627 = smul.u32 %s29, 16
      %s628 = ssub.s32 %s627, 1
      %p629 = scmp.gt.s32.totalorder %s628, 0
      %s630 = scalar_select %p629, %s628, 0
      %s631 = smul.u32 16, %s29
      %p632 = scmp.lt.s32.totalorder %s28, 1
      %s633 = scalar_select %p632, %s28, 1
      %p634 = scmp.lt.s32.totalorder %s631, 15
      %s635 = scalar_select %p634, %s631, 15
      %s636 = smul.addr %s633, 16
      %s637 = sadd.s32 %s635, %s636
      %s638 = smul.addr %s637, 4
      %s639 = scalar_lea.vmem %s11, %s638
      %s640 = smul.u32 16, %s29
      %v642 = vld [vmem:[%s584] sm:$0xf]
      %p643 = scmp.eq.s32.totalorder %s29, 0
      %s644 = scalar_select %p643, 1, 0
      %v645 = vstv %s644
      %vm646 = vcmp.eq.s32.totalorder %v645, 1
      %v647 = vsel %vm646, 0, %v642
      %v648 = vld [vmem:[%s600] sm:$0xf]
      %v649 = vsel %vm646, 0, %v648
      %v650 = vld [vmem:[%s626] sm:$0xf]
      %v651 = vsel %vm646, 0, %v650
      %v652 = vld [vmem:[%s571] sm:$0xf]
      %v653 = vld [vmem:[%s571 + $0x4] sm:$0xf]
      %v654 = vld [vmem:[%s571 + $0x8] sm:$0xf]
      %v655 = vld [vmem:[%s571 + $0xc] sm:$0xf]
      %v656 = vld [vmem:[%s571 + $0x10] sm:$0xf]
      %v657 = vld [vmem:[%s571 + $0x14] sm:$0xf]
      %v658 = vld [vmem:[%s571 + $0x18] sm:$0xf]
      %v659 = vld [vmem:[%s571 + $0x1c] sm:$0xf]
      %v668 = vunpack.c.l.b16 %v652
      %v669 = vunpack.c.l.b16 %v653
      %v670 = vunpack.c.l.b16 %v654
      %v671 = vunpack.c.l.b16 %v655
      %v672 = vunpack.c.l.b16 %v656
      %v673 = vunpack.c.l.b16 %v657
      %v674 = vunpack.c.l.b16 %v658
      %v675 = vunpack.c.l.b16 %v659
      %v676 = vpack.c.b16 %v668, %v668
      %v677 = vpack.c.b16 %v669, %v669
      %v678 = vpack.c.b16 %v670, %v670
      %v679 = vpack.c.b16 %v671, %v671
      %v680 = vpack.c.b16 %v672, %v672
      %v681 = vpack.c.b16 %v673, %v673
      %v682 = vpack.c.b16 %v674, %v674
      %v683 = vpack.c.b16 %v675, %v675
      %684 = vrot.lane.b32.xlu0 %v676, 8
      %v685 = vpop.permute.xlu0 %684
      %686 = vrot.lane.b32.xlu0 %v677, 8
      %v687 = vpop.permute.xlu0 %686
      %688 = vrot.lane.b32.xlu0 %v678, 8
      %v689 = vpop.permute.xlu0 %688
      %690 = vrot.lane.b32.xlu0 %v679, 8
      %v691 = vpop.permute.xlu0 %690
      %692 = vrot.lane.b32.xlu0 %v680, 8
      %v693 = vpop.permute.xlu0 %692
      %694 = vrot.lane.b32.xlu0 %v681, 8
      %v695 = vpop.permute.xlu0 %694
      %696 = vrot.lane.b32.xlu0 %v682, 8
      %v697 = vpop.permute.xlu0 %696
      %698 = vrot.lane.b32.xlu0 %v683, 8
      %v699 = vpop.permute.xlu0 %698
      %v701 = vunpack.c.l.b16 %v649
      %v702 = vpack.c.b16 %v701, %v701
      %703 = vrot.lane.b32.xlu0 %v677, 16
      %v704 = vpop.permute.xlu0 %703
      %705 = vrot.lane.b32.xlu0 %v678, 16
      %v706 = vpop.permute.xlu0 %705
      %707 = vrot.lane.b32.xlu0 %v679, 16
      %v708 = vpop.permute.xlu0 %707
      %709 = vrot.lane.b32.xlu0 %v680, 16
      %v710 = vpop.permute.xlu0 %709
      %711 = vrot.lane.b32.xlu0 %v681, 16
      %v712 = vpop.permute.xlu0 %711
      %713 = vrot.lane.b32.xlu0 %v682, 16
      %v714 = vpop.permute.xlu0 %713
      %715 = vrot.lane.b32.xlu0 %v683, 16
      %v716 = vpop.permute.xlu0 %715
      %717 = vrot.lane.b32.xlu0 %v702, 16
      %v718 = vpop.permute.xlu0 %717
      %vm719 = vcmask 64512
      %v722 = vsel %vm719, %v647, %v685
      %v725 = vsel %vm719, %v652, %v687
      %v728 = vsel %vm719, %v653, %v689
      %v731 = vsel %vm719, %v654, %v691
      %v734 = vsel %vm719, %v655, %v693
      %v737 = vsel %vm719, %v656, %v695
      %v740 = vsel %vm719, %v657, %v697
      %v743 = vsel %vm719, %v658, %v699
      %vm744 = vcmask 130048
      %v746 = vsel %vm744, %v722, %v704
      %v748 = vsel %vm744, %v725, %v706
      %v750 = vsel %vm744, %v728, %v708
      %v752 = vsel %vm744, %v731, %v710
      %v754 = vsel %vm744, %v734, %v712
      %v756 = vsel %vm744, %v737, %v714
      %v758 = vsel %vm744, %v740, %v716
      %v760 = vsel %vm744, %v743, %v718
      %v761 = vshrl.u32 %v746, 16
      %v763 = vrot.slane %v761, 7
      %v764 = vshll.u32 %v746, 16
      %v766 = vor.u32 %v763, %v764
      %v767 = vshrl.u32 %v748, 16
      %v769 = vrot.slane %v767, 7
      %v770 = vshll.u32 %v748, 16
      %v772 = vor.u32 %v769, %v770
      %v773 = vshrl.u32 %v750, 16
      %v775 = vrot.slane %v773, 7
      %v776 = vshll.u32 %v750, 16
      %v778 = vor.u32 %v775, %v776
      %v779 = vshrl.u32 %v752, 16
      %v781 = vrot.slane %v779, 7
      %v782 = vshll.u32 %v752, 16
      %v784 = vor.u32 %v781, %v782
      %v785 = vshrl.u32 %v754, 16
      %v787 = vrot.slane %v785, 7
      %v788 = vshll.u32 %v754, 16
      %v790 = vor.u32 %v787, %v788
      %v791 = vshrl.u32 %v756, 16
      %v793 = vrot.slane %v791, 7
      %v794 = vshll.u32 %v756, 16
      %v796 = vor.u32 %v793, %v794
      %v797 = vshrl.u32 %v758, 16
      %v799 = vrot.slane %v797, 7
      %v800 = vshll.u32 %v758, 16
      %v802 = vor.u32 %v799, %v800
      %v803 = vshrl.u32 %v760, 16
      %v805 = vrot.slane %v803, 7
      %v806 = vshll.u32 %v760, 16
      %v808 = vor.u32 %v805, %v806
      %vm817 = vcmask 1040384
      %vm818 = vsmask.f32 256
      %vm819 = vmand %vm817, %vm818
      %v820 = vsel %vm819, 0, %v766
      %v821 = vsel %vm819, 0, %v772
      %v822 = vsel %vm819, 0, %v778
      %v823 = vsel %vm819, 0, %v784
      %v824 = vsel %vm819, 0, %v790
      %v825 = vsel %vm819, 0, %v796
      %v826 = vsel %vm819, 0, %v802
      %v827 = vsel %vm819, 0, %v808
      %v828 = vrot.slane %v764, 1
      %v829 = vor.u32 %v761, %v828
      %v830 = vrot.slane %v770, 1
      %v831 = vor.u32 %v767, %v830
      %v832 = vrot.slane %v776, 1
      %v833 = vor.u32 %v773, %v832
      %v834 = vrot.slane %v782, 1
      %v835 = vor.u32 %v779, %v834
      %v836 = vrot.slane %v788, 1
      %v837 = vor.u32 %v785, %v836
      %v838 = vrot.slane %v794, 1
      %v839 = vor.u32 %v791, %v838
      %v840 = vrot.slane %v800, 1
      %v841 = vor.u32 %v797, %v840
      %v842 = vrot.slane %v806, 1
      %v843 = vor.u32 %v803, %v842
      %vm852 = vcmask 1043456
      %vm853 = vsmask.f32 3328
      %vm854 = vmand %vm852, %vm853
      %v855 = vsel %vm854, %v829, 0
      %v856 = vsel %vm854, %v831, 0
      %v857 = vsel %vm854, %v833, 0
      %v858 = vsel %vm854, %v835, 0
      %v859 = vsel %vm854, %v837, 0
      %v860 = vsel %vm854, %v839, 0
      %v861 = vsel %vm854, %v841, 0
      %v862 = vsel %vm854, %v843, 0
      %v863 = vld [vmem:[%s7] sm:$0x1]
      %v864 = vld [vmem:[%s5] sm:$0xf]
      %v865 = vld [vmem:[%s5 + $0x4] sm:$0xf]
      %v866 = vld [vmem:[%s5 + $0x8] sm:$0xf]
      %v875 = vunpack.c.l.b16 %v820
      %v876 = vunpack.c.l.b16 %v821
      %v877 = vunpack.c.l.b16 %v822
      %v878 = vunpack.c.l.b16 %v823
      %v879 = vunpack.c.l.b16 %v824
      %v880 = vunpack.c.l.b16 %v825
      %v881 = vunpack.c.l.b16 %v826
      %v882 = vunpack.c.l.b16 %v827
      %v883 = vpack.c.b16 %v876, %v875
      %v884 = vpack.c.b16 %v878, %v877
      %v885 = vpack.c.b16 %v880, %v879
      %v886 = vpack.c.b16 %v882, %v881
      %v890 = vunpack.c.l.b16 %v864
      %v891 = vunpack.c.l.b16 %v865
      %v892 = vunpack.c.l.b16 %v866
      %v893 = vpack.c.b16 %v891, %v890
      %v894 = vpack.c.b16 %v892, %v892
      %vm896 = vcmask 195584
      %v898 = vsel %vm896, %v883, 0
      %v901 = vsel %vm896, %v884, 0
      %v904 = vsel %vm896, %v885, 0
      %v907 = vsel %vm896, %v886, 0
      %vm909 = vcmask 1043456
      %v911 = vsel %vm909, %v894, 0
      %913 = vmatprep.subr.bf16.mxu0 0
      %914 = vmatpush1.bf16.msra.mxu0 %v893
      %915 = vmatprep.subr.bf16.mxu0 0
      %916 = vmatpush1.bf16.msra.mxu0 %v911
      %917 = vmatprep.subr.bf16.mxu0 0
      %918 = vmatpush1.bf16.msra.mxu0 0
      %919 = vmatprep.subr.bf16.mxu0 0
      %920 = vmatpush1.bf16.msra.mxu0 0
      %921 = vmatprep.subr.bf16.mxu0 0
      %922 = vmatpush1.bf16.msra.mxu0 0
      %923 = vmatprep.subr.bf16.mxu0 0
      %924 = vmatpush1.bf16.msra.mxu0 0
      %925 = vmatprep.subr.bf16.mxu0 0
      %926 = vmatpush1.bf16.msra.mxu0 0
      %927 = vmatprep.subr.bf16.mxu0 0
      %928 = vmatpush1.bf16.msra.mxu0 0
      %929 = vmatprep.subr.bf16.mxu0 0
      %930 = vmatpush1.bf16.msra.mxu0 0
      %931 = vmatprep.subr.bf16.mxu0 0
      %932 = vmatpush1.bf16.msra.mxu0 0
      %933 = vmatprep.subr.bf16.mxu0 0
      %934 = vmatpush1.bf16.msra.mxu0 0
      %935 = vmatprep.subr.bf16.mxu0 0
      %936 = vmatpush1.bf16.msra.mxu0 0
      %937 = vmatprep.subr.bf16.mxu0 0
      %938 = vmatpush1.bf16.msra.mxu0 0
      %939 = vmatprep.subr.bf16.mxu0 0
      %940 = vmatpush1.bf16.msra.mxu0 0
      %941 = vmatprep.subr.bf16.mxu0 0
      %942 = vmatpush1.bf16.msra.mxu0 0
      %943 = vmatprep.subr.bf16.mxu0 0
      %944 = vmatpush1.bf16.msra.mxu0 0
      %945 = vmatprep.mubr.bf16.mxu0 0
      %946 = vmatmul.mubr.bf16.gmra.mrb[0].mxu0 %v898
      %v947 = vpop.f32.mrb[0].mxu0
      %v948 = vadd.f32 0.0, %v947
      %v949 = vpop.f32.mrb[0].mxu0
      %v950 = vpop.f32.mrb[0].mxu0
      %v951 = vadd.f32 0.0, %v950
      %v952 = vpop.f32.mrb[0].mxu0
      %953 = vmatprep.mubr.bf16.mxu0 0
      %954 = vmatmul.mubr.bf16.gmra.mrb[0].mxu0 %v901
      %v955 = vpop.f32.mrb[0].mxu0
      %v956 = vadd.f32 0.0, %v955
      %v957 = vpop.f32.mrb[0].mxu0
      %v958 = vpop.f32.mrb[0].mxu0
      %v959 = vadd.f32 0.0, %v958
      %v960 = vpop.f32.mrb[0].mxu0
      %961 = vmatprep.mubr.bf16.mxu0 0
      %962 = vmatmul.mubr.bf16.gmra.mrb[0].mxu0 %v904
      %v963 = vpop.f32.mrb[0].mxu0
      %v964 = vadd.f32 0.0, %v963
      %v965 = vpop.f32.mrb[0].mxu0
      %v966 = vpop.f32.mrb[0].mxu0
      %v967 = vadd.f32 0.0, %v966
      %v968 = vpop.f32.mrb[0].mxu0
      %969 = vmatprep.mubr.bf16.mxu0 0
      %970 = vmatmul.mubr.bf16.gmra.mrb[0].mxu0 %v907
      %v971 = vpop.f32.mrb[0].mxu0
      %v972 = vadd.f32 0.0, %v971
      %v973 = vpop.f32.mrb[0].mxu0
      %v974 = vpop.f32.mrb[0].mxu0
      %v975 = vadd.f32 0.0, %v974
      %v976 = vpop.f32.mrb[0].mxu0
      %977 = vdwg.mxu0
      %v979 = vlaneseq
      %v980 = vshrl.u32 %v979, 7
      %v981 = vsub.s32 0, %v980
      %v982 = vrot.slane %v863, %v981
      %v984 = vadd.f32 %v982, %v948
      %v985 = vadd.f32 %v982, %v951
      %v986 = vadd.f32 %v982, %v956
      %v987 = vadd.f32 %v982, %v959
      %v988 = vadd.f32 %v982, %v964
      %v989 = vadd.f32 %v982, %v967
      %v990 = vadd.f32 %v982, %v972
      %v991 = vadd.f32 %v982, %v975
      %s992 = scalar_lea.vmem %s5, 12
      %v993 = vld [vmem:[%s992] sm:$0xf]
      %v994 = vld [vmem:[%s992 + $0x4] sm:$0xf]
      %v995 = vld [vmem:[%s992 + $0x8] sm:$0xf]
      %v1004 = vunpack.c.l.b16 %v746
      %v1005 = vunpack.c.l.b16 %v748
      %v1006 = vunpack.c.l.b16 %v750
      %v1007 = vunpack.c.l.b16 %v752
      %v1008 = vunpack.c.l.b16 %v754
      %v1009 = vunpack.c.l.b16 %v756
      %v1010 = vunpack.c.l.b16 %v758
      %v1011 = vunpack.c.l.b16 %v760
      %v1012 = vpack.c.b16 %v1005, %v1004
      %v1013 = vpack.c.b16 %v1007, %v1006
      %v1014 = vpack.c.b16 %v1009, %v1008
      %v1015 = vpack.c.b16 %v1011, %v1010
      %v1019 = vunpack.c.l.b16 %v993
      %v1020 = vunpack.c.l.b16 %v994
      %v1021 = vunpack.c.l.b16 %v995
      %v1022 = vpack.c.b16 %v1020, %v1019
      %v1023 = vpack.c.b16 %v1021, %v1021
      %v1026 = vsel %vm896, %v1012, 0
      %v1029 = vsel %vm896, %v1013, 0
      %v1032 = vsel %vm896, %v1014, 0
      %v1035 = vsel %vm896, %v1015, 0
      %v1038 = vsel %vm909, %v1023, 0
      %1040 = vmatprep.subr.bf16.mxu0 0
      %1041 = vmatpush1.bf16.msra.mxu0 %v1022
      %1042 = vmatprep.subr.bf16.mxu0 0
      %1043 = vmatpush1.bf16.msra.mxu0 %v1038
      %1044 = vmatprep.subr.bf16.mxu0 0
      %1045 = vmatpush1.bf16.msra.mxu0 0
      %1046 = vmatprep.subr.bf16.mxu0 0
      %1047 = vmatpush1.bf16.msra.mxu0 0
      %1048 = vmatprep.subr.bf16.mxu0 0
      %1049 = vmatpush1.bf16.msra.mxu0 0
      %1050 = vmatprep.subr.bf16.mxu0 0
      %1051 = vmatpush1.bf16.msra.mxu0 0
      %1052 = vmatprep.subr.bf16.mxu0 0
      %1053 = vmatpush1.bf16.msra.mxu0 0
      %1054 = vmatprep.subr.bf16.mxu0 0
      %1055 = vmatpush1.bf16.msra.mxu0 0
      %1056 = vmatprep.subr.bf16.mxu0 0
      %1057 = vmatpush1.bf16.msra.mxu0 0
      %1058 = vmatprep.subr.bf16.mxu0 0
      %1059 = vmatpush1.bf16.msra.mxu0 0
      %1060 = vmatprep.subr.bf16.mxu0 0
      %1061 = vmatpush1.bf16.msra.mxu0 0
      %1062 = vmatprep.subr.bf16.mxu0 0
      %1063 = vmatpush1.bf16.msra.mxu0 0
      %1064 = vmatprep.subr.bf16.mxu0 0
      %1065 = vmatpush1.bf16.msra.mxu0 0
      %1066 = vmatprep.subr.bf16.mxu0 0
      %1067 = vmatpush1.bf16.msra.mxu0 0
      %1068 = vmatprep.subr.bf16.mxu0 0
      %1069 = vmatpush1.bf16.msra.mxu0 0
      %1070 = vmatprep.subr.bf16.mxu0 0
      %1071 = vmatpush1.bf16.msra.mxu0 0
      %1072 = vmatprep.mubr.bf16.mxu0 0
      %1073 = vmatmul.mubr.bf16.gmra.mrb[0].mxu0 %v1026
      %v1074 = vpop.f32.mrb[0].mxu0
      %v1075 = vadd.f32 0.0, %v1074
      %v1076 = vpop.f32.mrb[0].mxu0
      %v1077 = vpop.f32.mrb[0].mxu0
      %v1078 = vadd.f32 0.0, %v1077
      %v1079 = vpop.f32.mrb[0].mxu0
      %1080 = vmatprep.mubr.bf16.mxu0 0
      %1081 = vmatmul.mubr.bf16.gmra.mrb[0].mxu0 %v1029
      %v1082 = vpop.f32.mrb[0].mxu0
      %v1083 = vadd.f32 0.0, %v1082
      %v1084 = vpop.f32.mrb[0].mxu0
      %v1085 = vpop.f32.mrb[0].mxu0
      %v1086 = vadd.f32 0.0, %v1085
      %v1087 = vpop.f32.mrb[0].mxu0
      %1088 = vmatprep.mubr.bf16.mxu0 0
      %1089 = vmatmul.mubr.bf16.gmra.mrb[0].mxu0 %v1032
      %v1090 = vpop.f32.mrb[0].mxu0
      %v1091 = vadd.f32 0.0, %v1090
      %v1092 = vpop.f32.mrb[0].mxu0
      %v1093 = vpop.f32.mrb[0].mxu0
      %v1094 = vadd.f32 0.0, %v1093
      %v1095 = vpop.f32.mrb[0].mxu0
      %1096 = vmatprep.mubr.bf16.mxu0 0
      %1097 = vmatmul.mubr.bf16.gmra.mrb[0].mxu0 %v1035
      %v1098 = vpop.f32.mrb[0].mxu0
      %v1099 = vadd.f32 0.0, %v1098
      %v1100 = vpop.f32.mrb[0].mxu0
      %v1101 = vpop.f32.mrb[0].mxu0
      %v1102 = vadd.f32 0.0, %v1101
      %v1103 = vpop.f32.mrb[0].mxu0
      %1104 = vdwg.mxu0
      %v1105 = vadd.f32 %v984, %v1075
      %v1106 = vadd.f32 %v985, %v1078
      %v1107 = vadd.f32 %v986, %v1083
      %v1108 = vadd.f32 %v987, %v1086
      %v1109 = vadd.f32 %v988, %v1091
      %v1110 = vadd.f32 %v989, %v1094
      %v1111 = vadd.f32 %v990, %v1099
      %v1112 = vadd.f32 %v991, %v1102
      %s1113 = scalar_lea.vmem %s5, 24
      %v1114 = vld [vmem:[%s1113] sm:$0xf]
      %v1115 = vld [vmem:[%s1113 + $0x4] sm:$0xf]
      %v1116 = vld [vmem:[%s1113 + $0x8] sm:$0xf]
      %v1125 = vunpack.c.l.b16 %v855
      %v1126 = vunpack.c.l.b16 %v856
      %v1127 = vunpack.c.l.b16 %v857
      %v1128 = vunpack.c.l.b16 %v858
      %v1129 = vunpack.c.l.b16 %v859
      %v1130 = vunpack.c.l.b16 %v860
      %v1131 = vunpack.c.l.b16 %v861
      %v1132 = vunpack.c.l.b16 %v862
      %v1133 = vpack.c.b16 %v1126, %v1125
      %v1134 = vpack.c.b16 %v1128, %v1127
      %v1135 = vpack.c.b16 %v1130, %v1129
      %v1136 = vpack.c.b16 %v1132, %v1131
      %v1140 = vunpack.c.l.b16 %v1114
      %v1141 = vunpack.c.l.b16 %v1115
      %v1142 = vunpack.c.l.b16 %v1116
      %v1143 = vpack.c.b16 %v1141, %v1140
      %v1144 = vpack.c.b16 %v1142, %v1142
      %v1147 = vsel %vm896, %v1133, 0
      %v1150 = vsel %vm896, %v1134, 0
      %v1153 = vsel %vm896, %v1135, 0
      %v1156 = vsel %vm896, %v1136, 0
      %v1159 = vsel %vm909, %v1144, 0
      %1161 = vmatprep.subr.bf16.mxu0 0
      %1162 = vmatpush1.bf16.msra.mxu0 %v1143
      %1163 = vmatprep.subr.bf16.mxu0 0
      %1164 = vmatpush1.bf16.msra.mxu0 %v1159
      %1165 = vmatprep.subr.bf16.mxu0 0
      %1166 = vmatpush1.bf16.msra.mxu0 0
      %1167 = vmatprep.subr.bf16.mxu0 0
      %1168 = vmatpush1.bf16.msra.mxu0 0
      %1169 = vmatprep.subr.bf16.mxu0 0
      %1170 = vmatpush1.bf16.msra.mxu0 0
      %1171 = vmatprep.subr.bf16.mxu0 0
      %1172 = vmatpush1.bf16.msra.mxu0 0
      %1173 = vmatprep.subr.bf16.mxu0 0
      %1174 = vmatpush1.bf16.msra.mxu0 0
      %1175 = vmatprep.subr.bf16.mxu0 0
      %1176 = vmatpush1.bf16.msra.mxu0 0
      %1177 = vmatprep.subr.bf16.mxu0 0
      %1178 = vmatpush1.bf16.msra.mxu0 0
      %1179 = vmatprep.subr.bf16.mxu0 0
      %1180 = vmatpush1.bf16.msra.mxu0 0
      %1181 = vmatprep.subr.bf16.mxu0 0
      %1182 = vmatpush1.bf16.msra.mxu0 0
      %1183 = vmatprep.subr.bf16.mxu0 0
      %1184 = vmatpush1.bf16.msra.mxu0 0
      %1185 = vmatprep.subr.bf16.mxu0 0
      %1186 = vmatpush1.bf16.msra.mxu0 0
      %1187 = vmatprep.subr.bf16.mxu0 0
      %1188 = vmatpush1.bf16.msra.mxu0 0
      %1189 = vmatprep.subr.bf16.mxu0 0
      %1190 = vmatpush1.bf16.msra.mxu0 0
      %1191 = vmatprep.subr.bf16.mxu0 0
      %1192 = vmatpush1.bf16.msra.mxu0 0
      %1193 = vmatprep.mubr.bf16.mxu0 0
      %1194 = vmatmul.mubr.bf16.gmra.mrb[0].mxu0 %v1147
      %v1195 = vpop.f32.mrb[0].mxu0
      %v1196 = vadd.f32 0.0, %v1195
      %v1197 = vpop.f32.mrb[0].mxu0
      %v1198 = vpop.f32.mrb[0].mxu0
      %v1199 = vadd.f32 0.0, %v1198
      %v1200 = vpop.f32.mrb[0].mxu0
      %1201 = vmatprep.mubr.bf16.mxu0 0
      %1202 = vmatmul.mubr.bf16.gmra.mrb[0].mxu0 %v1150
      %v1203 = vpop.f32.mrb[0].mxu0
      %v1204 = vadd.f32 0.0, %v1203
      %v1205 = vpop.f32.mrb[0].mxu0
      %v1206 = vpop.f32.mrb[0].mxu0
      %v1207 = vadd.f32 0.0, %v1206
      %v1208 = vpop.f32.mrb[0].mxu0
      %1209 = vmatprep.mubr.bf16.mxu0 0
      %1210 = vmatmul.mubr.bf16.gmra.mrb[0].mxu0 %v1153
      %v1211 = vpop.f32.mrb[0].mxu0
      %v1212 = vadd.f32 0.0, %v1211
      %v1213 = vpop.f32.mrb[0].mxu0
      %v1214 = vpop.f32.mrb[0].mxu0
      %v1215 = vadd.f32 0.0, %v1214
      %v1216 = vpop.f32.mrb[0].mxu0
      %1217 = vmatprep.mubr.bf16.mxu0 0
      %1218 = vmatmul.mubr.bf16.gmra.mrb[0].mxu0 %v1156
      %v1219 = vpop.f32.mrb[0].mxu0
      %v1220 = vadd.f32 0.0, %v1219
      %v1221 = vpop.f32.mrb[0].mxu0
      %v1222 = vpop.f32.mrb[0].mxu0
      %v1223 = vadd.f32 0.0, %v1222
      %v1224 = vpop.f32.mrb[0].mxu0
      %1225 = vdwg.mxu0
      %v1226 = vadd.f32 %v1105, %v1196
      %v1227 = vadd.f32 %v1106, %v1199
      %v1228 = vadd.f32 %v1107, %v1204
      %v1229 = vadd.f32 %v1108, %v1207
      %v1230 = vadd.f32 %v1109, %v1212
      %v1231 = vadd.f32 %v1110, %v1215
      %v1232 = vadd.f32 %v1111, %v1220
      %v1233 = vadd.f32 %v1112, %v1223
      %v1234 = vld [vmem:[%s613] sm:$0xf]
      %v1235 = vld [vmem:[%s613 + $0x4] sm:$0xf]
      %v1236 = vld [vmem:[%s613 + $0x8] sm:$0xf]
      %v1237 = vld [vmem:[%s613 + $0xc] sm:$0xf]
      %v1238 = vld [vmem:[%s613 + $0x10] sm:$0xf]
      %v1239 = vld [vmem:[%s613 + $0x14] sm:$0xf]
      %v1240 = vld [vmem:[%s613 + $0x18] sm:$0xf]
      %v1241 = vld [vmem:[%s613 + $0x1c] sm:$0xf]
      %v1242 = vld [vmem:[%s613 + $0x20] sm:$0xf]
      %v1243 = vld [vmem:[%s613 + $0x24] sm:$0xf]
      %v1244 = vld [vmem:[%s613 + $0x28] sm:$0xf]
      %v1245 = vld [vmem:[%s613 + $0x2c] sm:$0xf]
      %v1246 = vld [vmem:[%s613 + $0x30] sm:$0xf]
      %v1247 = vld [vmem:[%s613 + $0x34] sm:$0xf]
      %v1248 = vld [vmem:[%s613 + $0x38] sm:$0xf]
      %v1249 = vld [vmem:[%s613 + $0x3c] sm:$0xf]
      %v1266 = vunpack.c.l.b16 %v1234
      %v1267 = vunpack.c.l.b16 %v1235
      %v1268 = vunpack.c.l.b16 %v1236
      %v1269 = vunpack.c.l.b16 %v1237
      %v1270 = vunpack.c.l.b16 %v1238
      %v1271 = vunpack.c.l.b16 %v1239
      %v1272 = vunpack.c.l.b16 %v1240
      %v1273 = vunpack.c.l.b16 %v1241
      %v1274 = vunpack.c.l.b16 %v1242
      %v1275 = vunpack.c.l.b16 %v1243
      %v1276 = vunpack.c.l.b16 %v1244
      %v1277 = vunpack.c.l.b16 %v1245
      %v1278 = vunpack.c.l.b16 %v1246
      %v1279 = vunpack.c.l.b16 %v1247
      %v1280 = vunpack.c.l.b16 %v1248
      %v1281 = vunpack.c.l.b16 %v1249
      %v1282 = vpack.c.b16 %v1266, %v1266
      %v1283 = vpack.c.b16 %v1267, %v1267
      %v1284 = vpack.c.b16 %v1268, %v1268
      %v1285 = vpack.c.b16 %v1269, %v1269
      %v1286 = vpack.c.b16 %v1270, %v1270
      %v1287 = vpack.c.b16 %v1271, %v1271
      %v1288 = vpack.c.b16 %v1272, %v1272
      %v1289 = vpack.c.b16 %v1273, %v1273
      %v1290 = vpack.c.b16 %v1274, %v1274
      %v1291 = vpack.c.b16 %v1275, %v1275
      %v1292 = vpack.c.b16 %v1276, %v1276
      %v1293 = vpack.c.b16 %v1277, %v1277
      %v1294 = vpack.c.b16 %v1278, %v1278
      %v1295 = vpack.c.b16 %v1279, %v1279
      %v1296 = vpack.c.b16 %v1280, %v1280
      %v1297 = vpack.c.b16 %v1281, %v1281
      %v1299 = vshrl.u32 %v1282, 16
      %v1301 = vrot.slane %v1299, 7
      %v1302 = vshll.u32 %v1282, 16
      %v1304 = vor.u32 %v1301, %v1302
      %v1306 = vshrl.u32 %v1283, 16
      %v1308 = vrot.slane %v1306, 7
      %v1309 = vshll.u32 %v1283, 16
      %v1311 = vor.u32 %v1308, %v1309
      %v1313 = vshrl.u32 %v1284, 16
      %v1315 = vrot.slane %v1313, 7
      %v1316 = vshll.u32 %v1284, 16
      %v1318 = vor.u32 %v1315, %v1316
      %v1320 = vshrl.u32 %v1285, 16
      %v1322 = vrot.slane %v1320, 7
      %v1323 = vshll.u32 %v1285, 16
      %v1325 = vor.u32 %v1322, %v1323
      %v1327 = vshrl.u32 %v1286, 16
      %v1329 = vrot.slane %v1327, 7
      %v1330 = vshll.u32 %v1286, 16
      %v1332 = vor.u32 %v1329, %v1330
      %v1334 = vshrl.u32 %v1287, 16
      %v1336 = vrot.slane %v1334, 7
      %v1337 = vshll.u32 %v1287, 16
      %v1339 = vor.u32 %v1336, %v1337
      %v1341 = vshrl.u32 %v1288, 16
      %v1343 = vrot.slane %v1341, 7
      %v1344 = vshll.u32 %v1288, 16
      %v1346 = vor.u32 %v1343, %v1344
      %v1348 = vshrl.u32 %v1289, 16
      %v1350 = vrot.slane %v1348, 7
      %v1351 = vshll.u32 %v1289, 16
      %v1353 = vor.u32 %v1350, %v1351
      %v1355 = vshrl.u32 %v1290, 16
      %v1357 = vrot.slane %v1355, 7
      %v1358 = vshll.u32 %v1290, 16
      %v1360 = vor.u32 %v1357, %v1358
      %v1362 = vshrl.u32 %v1291, 16
      %v1364 = vrot.slane %v1362, 7
      %v1365 = vshll.u32 %v1291, 16
      %v1367 = vor.u32 %v1364, %v1365
      %v1369 = vshrl.u32 %v1292, 16
      %v1371 = vrot.slane %v1369, 7
      %v1372 = vshll.u32 %v1292, 16
      %v1374 = vor.u32 %v1371, %v1372
      %v1376 = vshrl.u32 %v1293, 16
      %v1378 = vrot.slane %v1376, 7
      %v1379 = vshll.u32 %v1293, 16
      %v1381 = vor.u32 %v1378, %v1379
      %v1383 = vshrl.u32 %v1294, 16
      %v1385 = vrot.slane %v1383, 7
      %v1386 = vshll.u32 %v1294, 16
      %v1388 = vor.u32 %v1385, %v1386
      %v1390 = vshrl.u32 %v1295, 16
      %v1392 = vrot.slane %v1390, 7
      %v1393 = vshll.u32 %v1295, 16
      %v1395 = vor.u32 %v1392, %v1393
      %v1397 = vshrl.u32 %v1296, 16
      %v1399 = vrot.slane %v1397, 7
      %v1400 = vshll.u32 %v1296, 16
      %v1402 = vor.u32 %v1399, %v1400
      %v1404 = vshrl.u32 %v1297, 16
      %v1406 = vrot.slane %v1404, 7
      %v1407 = vshll.u32 %v1297, 16
      %v1409 = vor.u32 %v1406, %v1407
      %1410 = vrot.lane.b32.xlu0 %v1304, 120
      %v1411 = vpop.permute.xlu0 %1410
      %1412 = vrot.lane.b32.xlu0 %v1311, 120
      %v1413 = vpop.permute.xlu0 %1412
      %1414 = vrot.lane.b32.xlu0 %v1318, 120
      %v1415 = vpop.permute.xlu0 %1414
      %1416 = vrot.lane.b32.xlu0 %v1325, 120
      %v1417 = vpop.permute.xlu0 %1416
      %1418 = vrot.lane.b32.xlu0 %v1332, 120
      %v1419 = vpop.permute.xlu0 %1418
      %1420 = vrot.lane.b32.xlu0 %v1339, 120
      %v1421 = vpop.permute.xlu0 %1420
      %1422 = vrot.lane.b32.xlu0 %v1346, 120
      %v1423 = vpop.permute.xlu0 %1422
      %1424 = vrot.lane.b32.xlu0 %v1353, 120
      %v1425 = vpop.permute.xlu0 %1424
      %1426 = vrot.lane.b32.xlu0 %v1360, 120
      %v1427 = vpop.permute.xlu0 %1426
      %1428 = vrot.lane.b32.xlu0 %v1367, 120
      %v1429 = vpop.permute.xlu0 %1428
      %1430 = vrot.lane.b32.xlu0 %v1374, 120
      %v1431 = vpop.permute.xlu0 %1430
      %1432 = vrot.lane.b32.xlu0 %v1381, 120
      %v1433 = vpop.permute.xlu0 %1432
      %1434 = vrot.lane.b32.xlu0 %v1388, 120
      %v1435 = vpop.permute.xlu0 %1434
      %1436 = vrot.lane.b32.xlu0 %v1395, 120
      %v1437 = vpop.permute.xlu0 %1436
      %1438 = vrot.lane.b32.xlu0 %v1402, 120
      %v1439 = vpop.permute.xlu0 %1438
      %1440 = vrot.lane.b32.xlu0 %v1409, 120
      %v1441 = vpop.permute.xlu0 %1440
      %v1458 = vsel %vm819, 0, %v1411
      %v1459 = vsel %vm819, 0, %v1413
      %v1460 = vsel %vm819, 0, %v1415
      %v1461 = vsel %vm819, 0, %v1417
      %v1462 = vsel %vm819, 0, %v1419
      %v1463 = vsel %vm819, 0, %v1421
      %v1464 = vsel %vm819, 0, %v1423
      %v1465 = vsel %vm819, 0, %v1425
      %v1466 = vsel %vm819, 0, %v1427
      %v1467 = vsel %vm819, 0, %v1429
      %v1468 = vsel %vm819, 0, %v1431
      %v1469 = vsel %vm819, 0, %v1433
      %v1470 = vsel %vm819, 0, %v1435
      %v1471 = vsel %vm819, 0, %v1437
      %v1472 = vsel %vm819, 0, %v1439
      %v1473 = vsel %vm819, 0, %v1441
      %v1475 = vunpack.c.l.b16 %v651
      %v1476 = vpack.c.b16 %v1475, %v1475
      %v1478 = vshrl.u32 %v1476, 16
      %v1480 = vrot.slane %v1478, 7
      %v1481 = vshll.u32 %v1476, 16
      %v1483 = vor.u32 %v1480, %v1481
      %1484 = vrot.lane.b32.xlu0 %v1483, 120
      %v1485 = vpop.permute.xlu0 %1484
      %v1487 = vsel %vm819, 0, %v1485
      %v1488 = vld [vmem:[%s8] sm:$0x1]
      %1489 = vrot.lane.b32.xlu0 %v1476, 8
      %v1490 = vpop.permute.xlu0 %1489
      %1491 = vrot.lane.b32.xlu0 %v1283, 8
      %v1492 = vpop.permute.xlu0 %1491
      %1493 = vrot.lane.b32.xlu0 %v1285, 8
      %v1494 = vpop.permute.xlu0 %1493
      %1495 = vrot.lane.b32.xlu0 %v1287, 8
      %v1496 = vpop.permute.xlu0 %1495
      %1497 = vrot.lane.b32.xlu0 %v1289, 8
      %v1498 = vpop.permute.xlu0 %1497
      %1499 = vrot.lane.b32.xlu0 %v1291, 8
      %v1500 = vpop.permute.xlu0 %1499
      %1501 = vrot.lane.b32.xlu0 %v1293, 8
      %v1502 = vpop.permute.xlu0 %1501
      %1503 = vrot.lane.b32.xlu0 %v1295, 8
      %v1504 = vpop.permute.xlu0 %1503
      %v1507 = vsel %vm719, %v1487, %v1490
      %v1510 = vsel %vm719, %v1459, %v1492
      %v1513 = vsel %vm719, %v1461, %v1494
      %v1516 = vsel %vm719, %v1463, %v1496
      %v1519 = vsel %vm719, %v1465, %v1498
      %v1522 = vsel %vm719, %v1467, %v1500
      %v1525 = vsel %vm719, %v1469, %v1502
      %v1528 = vsel %vm719, %v1471, %v1504
      %v1529 = vld [vmem:[%s6] sm:$0xf]
      %v1530 = vld [vmem:[%s6 + $0x4] sm:$0xf]
      %v1531 = vld [vmem:[%s6 + $0x8] sm:$0xf]
      %v1540 = vunpack.c.l.b16 %v1507
      %v1541 = vunpack.c.l.b16 %v1510
      %v1542 = vunpack.c.l.b16 %v1513
      %v1543 = vunpack.c.l.b16 %v1516
      %v1544 = vunpack.c.l.b16 %v1519
      %v1545 = vunpack.c.l.b16 %v1522
      %v1546 = vunpack.c.l.b16 %v1525
      %v1547 = vunpack.c.l.b16 %v1528
      %v1548 = vpack.c.b16 %v1541, %v1540
      %v1549 = vpack.c.b16 %v1543, %v1542
      %v1550 = vpack.c.b16 %v1545, %v1544
      %v1551 = vpack.c.b16 %v1547, %v1546
      %v1555 = vunpack.c.l.b16 %v1529
      %v1556 = vunpack.c.l.b16 %v1530
      %v1557 = vunpack.c.l.b16 %v1531
      %v1558 = vpack.c.b16 %v1556, %v1555
      %v1559 = vpack.c.b16 %v1557, %v1557
      %v1562 = vsel %vm896, %v1548, 0
      %v1565 = vsel %vm896, %v1549, 0
      %v1568 = vsel %vm896, %v1550, 0
      %v1571 = vsel %vm896, %v1551, 0
      %v1574 = vsel %vm909, %v1559, 0
      %1576 = vmatprep.subr.bf16.mxu0 0
      %1577 = vmatpush1.bf16.msra.mxu0 %v1558
      %1578 = vmatprep.subr.bf16.mxu0 0
      %1579 = vmatpush1.bf16.msra.mxu0 %v1574
      %1580 = vmatprep.subr.bf16.mxu0 0
      %1581 = vmatpush1.bf16.msra.mxu0 0
      %1582 = vmatprep.subr.bf16.mxu0 0
      %1583 = vmatpush1.bf16.msra.mxu0 0
      %1584 = vmatprep.subr.bf16.mxu0 0
      %1585 = vmatpush1.bf16.msra.mxu0 0
      %1586 = vmatprep.subr.bf16.mxu0 0
      %1587 = vmatpush1.bf16.msra.mxu0 0
      %1588 = vmatprep.subr.bf16.mxu0 0
      %1589 = vmatpush1.bf16.msra.mxu0 0
      %1590 = vmatprep.subr.bf16.mxu0 0
      %1591 = vmatpush1.bf16.msra.mxu0 0
      %1592 = vmatprep.subr.bf16.mxu0 0
      %1593 = vmatpush1.bf16.msra.mxu0 0
      %1594 = vmatprep.subr.bf16.mxu0 0
      %1595 = vmatpush1.bf16.msra.mxu0 0
      %1596 = vmatprep.subr.bf16.mxu0 0
      %1597 = vmatpush1.bf16.msra.mxu0 0
      %1598 = vmatprep.subr.bf16.mxu0 0
      %1599 = vmatpush1.bf16.msra.mxu0 0
      %1600 = vmatprep.subr.bf16.mxu0 0
      %1601 = vmatpush1.bf16.msra.mxu0 0
      %1602 = vmatprep.subr.bf16.mxu0 0
      %1603 = vmatpush1.bf16.msra.mxu0 0
      %1604 = vmatprep.subr.bf16.mxu0 0
      %1605 = vmatpush1.bf16.msra.mxu0 0
      %1606 = vmatprep.subr.bf16.mxu0 0
      %1607 = vmatpush1.bf16.msra.mxu0 0
      %1608 = vmatprep.mubr.bf16.mxu0 0
      %1609 = vmatmul.mubr.bf16.gmra.mrb[0].mxu0 %v1562
      %v1610 = vpop.f32.mrb[0].mxu0
      %v1611 = vadd.f32 0.0, %v1610
      %v1612 = vpop.f32.mrb[0].mxu0
      %v1613 = vpop.f32.mrb[0].mxu0
      %v1614 = vadd.f32 0.0, %v1613
      %v1615 = vpop.f32.mrb[0].mxu0
      %1616 = vmatprep.mubr.bf16.mxu0 0
      %1617 = vmatmul.mubr.bf16.gmra.mrb[0].mxu0 %v1565
      %v1618 = vpop.f32.mrb[0].mxu0
      %v1619 = vadd.f32 0.0, %v1618
      %v1620 = vpop.f32.mrb[0].mxu0
      %v1621 = vpop.f32.mrb[0].mxu0
      %v1622 = vadd.f32 0.0, %v1621
      %v1623 = vpop.f32.mrb[0].mxu0
      %1624 = vmatprep.mubr.bf16.mxu0 0
      %1625 = vmatmul.mubr.bf16.gmra.mrb[0].mxu0 %v1568
      %v1626 = vpop.f32.mrb[0].mxu0
      %v1627 = vadd.f32 0.0, %v1626
      %v1628 = vpop.f32.mrb[0].mxu0
      %v1629 = vpop.f32.mrb[0].mxu0
      %v1630 = vadd.f32 0.0, %v1629
      %v1631 = vpop.f32.mrb[0].mxu0
      %1632 = vmatprep.mubr.bf16.mxu0 0
      %1633 = vmatmul.mubr.bf16.gmra.mrb[0].mxu0 %v1571
      %v1634 = vpop.f32.mrb[0].mxu0
      %v1635 = vadd.f32 0.0, %v1634
      %v1636 = vpop.f32.mrb[0].mxu0
      %v1637 = vpop.f32.mrb[0].mxu0
      %v1638 = vadd.f32 0.0, %v1637
      %v1639 = vpop.f32.mrb[0].mxu0
      %1640 = vdwg.mxu0
      %v1642 = vlaneseq
      %v1643 = vshrl.u32 %v1642, 7
      %v1644 = vsub.s32 0, %v1643
      %v1645 = vrot.slane %v1488, %v1644
      %v1647 = vadd.f32 %v1645, %v1611
      %v1648 = vadd.f32 %v1645, %v1614
      %v1649 = vadd.f32 %v1645, %v1619
      %v1650 = vadd.f32 %v1645, %v1622
      %v1651 = vadd.f32 %v1645, %v1627
      %v1652 = vadd.f32 %v1645, %v1630
      %v1653 = vadd.f32 %v1645, %v1635
      %v1654 = vadd.f32 %v1645, %v1638
      %1655 = vrot.lane.b32.xlu0 %v1282, 8
      %v1656 = vpop.permute.xlu0 %1655
      %1657 = vrot.lane.b32.xlu0 %v1284, 8
      %v1658 = vpop.permute.xlu0 %1657
      %1659 = vrot.lane.b32.xlu0 %v1286, 8
      %v1660 = vpop.permute.xlu0 %1659
      %1661 = vrot.lane.b32.xlu0 %v1288, 8
      %v1662 = vpop.permute.xlu0 %1661
      %1663 = vrot.lane.b32.xlu0 %v1290, 8
      %v1664 = vpop.permute.xlu0 %1663
      %1665 = vrot.lane.b32.xlu0 %v1292, 8
      %v1666 = vpop.permute.xlu0 %1665
      %1667 = vrot.lane.b32.xlu0 %v1294, 8
      %v1668 = vpop.permute.xlu0 %1667
      %1669 = vrot.lane.b32.xlu0 %v1296, 8
      %v1670 = vpop.permute.xlu0 %1669
      %v1673 = vsel %vm719, %v1458, %v1656
      %v1676 = vsel %vm719, %v1460, %v1658
      %v1679 = vsel %vm719, %v1462, %v1660
      %v1682 = vsel %vm719, %v1464, %v1662
      %v1685 = vsel %vm719, %v1466, %v1664
      %v1688 = vsel %vm719, %v1468, %v1666
      %v1691 = vsel %vm719, %v1470, %v1668
      %v1694 = vsel %vm719, %v1472, %v1670
      %s1695 = scalar_lea.vmem %s6, 12
      %v1696 = vld [vmem:[%s1695] sm:$0xf]
      %v1697 = vld [vmem:[%s1695 + $0x4] sm:$0xf]
      %v1698 = vld [vmem:[%s1695 + $0x8] sm:$0xf]
      %v1707 = vunpack.c.l.b16 %v1673
      %v1708 = vunpack.c.l.b16 %v1676
      %v1709 = vunpack.c.l.b16 %v1679
      %v1710 = vunpack.c.l.b16 %v1682
      %v1711 = vunpack.c.l.b16 %v1685
      %v1712 = vunpack.c.l.b16 %v1688
      %v1713 = vunpack.c.l.b16 %v1691
      %v1714 = vunpack.c.l.b16 %v1694
      %v1715 = vpack.c.b16 %v1708, %v1707
      %v1716 = vpack.c.b16 %v1710, %v1709
      %v1717 = vpack.c.b16 %v1712, %v1711
      %v1718 = vpack.c.b16 %v1714, %v1713
      %v1722 = vunpack.c.l.b16 %v1696
      %v1723 = vunpack.c.l.b16 %v1697
      %v1724 = vunpack.c.l.b16 %v1698
      %v1725 = vpack.c.b16 %v1723, %v1722
      %v1726 = vpack.c.b16 %v1724, %v1724
      %v1729 = vsel %vm896, %v1715, 0
      %v1732 = vsel %vm896, %v1716, 0
      %v1735 = vsel %vm896, %v1717, 0
      %v1738 = vsel %vm896, %v1718, 0
      %v1741 = vsel %vm909, %v1726, 0
      %1743 = vmatprep.subr.bf16.mxu0 0
      %1744 = vmatpush1.bf16.msra.mxu0 %v1725
      %1745 = vmatprep.subr.bf16.mxu0 0
      %1746 = vmatpush1.bf16.msra.mxu0 %v1741
      %1747 = vmatprep.subr.bf16.mxu0 0
      %1748 = vmatpush1.bf16.msra.mxu0 0
      %1749 = vmatprep.subr.bf16.mxu0 0
      %1750 = vmatpush1.bf16.msra.mxu0 0
      %1751 = vmatprep.subr.bf16.mxu0 0
      %1752 = vmatpush1.bf16.msra.mxu0 0
      %1753 = vmatprep.subr.bf16.mxu0 0
      %1754 = vmatpush1.bf16.msra.mxu0 0
      %1755 = vmatprep.subr.bf16.mxu0 0
      %1756 = vmatpush1.bf16.msra.mxu0 0
      %1757 = vmatprep.subr.bf16.mxu0 0
      %1758 = vmatpush1.bf16.msra.mxu0 0
      %1759 = vmatprep.subr.bf16.mxu0 0
      %1760 = vmatpush1.bf16.msra.mxu0 0
      %1761 = vmatprep.subr.bf16.mxu0 0
      %1762 = vmatpush1.bf16.msra.mxu0 0
      %1763 = vmatprep.subr.bf16.mxu0 0
      %1764 = vmatpush1.bf16.msra.mxu0 0
      %1765 = vmatprep.subr.bf16.mxu0 0
      %1766 = vmatpush1.bf16.msra.mxu0 0
      %1767 = vmatprep.subr.bf16.mxu0 0
      %1768 = vmatpush1.bf16.msra.mxu0 0
      %1769 = vmatprep.subr.bf16.mxu0 0
      %1770 = vmatpush1.bf16.msra.mxu0 0
      %1771 = vmatprep.subr.bf16.mxu0 0
      %1772 = vmatpush1.bf16.msra.mxu0 0
      %1773 = vmatprep.subr.bf16.mxu0 0
      %1774 = vmatpush1.bf16.msra.mxu0 0
      %1775 = vmatprep.mubr.bf16.mxu0 0
      %1776 = vmatmul.mubr.bf16.gmra.mrb[0].mxu0 %v1729
      %v1777 = vpop.f32.mrb[0].mxu0
      %v1778 = vadd.f32 0.0, %v1777
      %v1779 = vpop.f32.mrb[0].mxu0
      %v1780 = vpop.f32.mrb[0].mxu0
      %v1781 = vadd.f32 0.0, %v1780
      %v1782 = vpop.f32.mrb[0].mxu0
      %1783 = vmatprep.mubr.bf16.mxu0 0
      %1784 = vmatmul.mubr.bf16.gmra.mrb[0].mxu0 %v1732
      %v1785 = vpop.f32.mrb[0].mxu0
      %v1786 = vadd.f32 0.0, %v1785
      %v1787 = vpop.f32.mrb[0].mxu0
      %v1788 = vpop.f32.mrb[0].mxu0
      %v1789 = vadd.f32 0.0, %v1788
      %v1790 = vpop.f32.mrb[0].mxu0
      %1791 = vmatprep.mubr.bf16.mxu0 0
      %1792 = vmatmul.mubr.bf16.gmra.mrb[0].mxu0 %v1735
      %v1793 = vpop.f32.mrb[0].mxu0
      %v1794 = vadd.f32 0.0, %v1793
      %v1795 = vpop.f32.mrb[0].mxu0
      %v1796 = vpop.f32.mrb[0].mxu0
      %v1797 = vadd.f32 0.0, %v1796
      %v1798 = vpop.f32.mrb[0].mxu0
      %1799 = vmatprep.mubr.bf16.mxu0 0
      %1800 = vmatmul.mubr.bf16.gmra.mrb[0].mxu0 %v1738
      %v1801 = vpop.f32.mrb[0].mxu0
      %v1802 = vadd.f32 0.0, %v1801
      %v1803 = vpop.f32.mrb[0].mxu0
      %v1804 = vpop.f32.mrb[0].mxu0
      %v1805 = vadd.f32 0.0, %v1804
      %v1806 = vpop.f32.mrb[0].mxu0
      %1807 = vdwg.mxu0
      %v1808 = vadd.f32 %v1647, %v1778
      %v1809 = vadd.f32 %v1648, %v1781
      %v1810 = vadd.f32 %v1649, %v1786
      %v1811 = vadd.f32 %v1650, %v1789
      %v1812 = vadd.f32 %v1651, %v1794
      %v1813 = vadd.f32 %v1652, %v1797
      %v1814 = vadd.f32 %v1653, %v1802
      %v1815 = vadd.f32 %v1654, %v1805
      %1816 = vrot.lane.b32.xlu0 %v1297, 8
      %v1817 = vpop.permute.xlu0 %1816
      %v1820 = vsel %vm719, %v1473, %v1817
      %s1821 = scalar_lea.vmem %s6, 24
      %v1822 = vld [vmem:[%s1821] sm:$0xf]
      %v1823 = vld [vmem:[%s1821 + $0x4] sm:$0xf]
      %v1824 = vld [vmem:[%s1821 + $0x8] sm:$0xf]
      %v1826 = vunpack.c.l.b16 %v1820
      %v1827 = vpack.c.b16 %v1542, %v1541
      %v1828 = vpack.c.b16 %v1544, %v1543
      %v1829 = vpack.c.b16 %v1546, %v1545
      %v1830 = vpack.c.b16 %v1826, %v1547
      %v1834 = vunpack.c.l.b16 %v1822
      %v1835 = vunpack.c.l.b16 %v1823
      %v1836 = vunpack.c.l.b16 %v1824
      %v1837 = vpack.c.b16 %v1835, %v1834
      %v1838 = vpack.c.b16 %v1836, %v1836
      %v1841 = vsel %vm896, %v1827, 0
      %v1844 = vsel %vm896, %v1828, 0
      %v1847 = vsel %vm896, %v1829, 0
      %v1850 = vsel %vm896, %v1830, 0
      %v1853 = vsel %vm909, %v1838, 0
      %1855 = vmatprep.subr.bf16.mxu0 0
      %1856 = vmatpush1.bf16.msra.mxu0 %v1837
      %1857 = vmatprep.subr.bf16.mxu0 0
      %1858 = vmatpush1.bf16.msra.mxu0 %v1853
      %1859 = vmatprep.subr.bf16.mxu0 0
      %1860 = vmatpush1.bf16.msra.mxu0 0
      %1861 = vmatprep.subr.bf16.mxu0 0
      %1862 = vmatpush1.bf16.msra.mxu0 0
      %1863 = vmatprep.subr.bf16.mxu0 0
      %1864 = vmatpush1.bf16.msra.mxu0 0
      %1865 = vmatprep.subr.bf16.mxu0 0
      %1866 = vmatpush1.bf16.msra.mxu0 0
      %1867 = vmatprep.subr.bf16.mxu0 0
      %1868 = vmatpush1.bf16.msra.mxu0 0
      %1869 = vmatprep.subr.bf16.mxu0 0
      %1870 = vmatpush1.bf16.msra.mxu0 0
      %1871 = vmatprep.subr.bf16.mxu0 0
      %1872 = vmatpush1.bf16.msra.mxu0 0
      %1873 = vmatprep.subr.bf16.mxu0 0
      %1874 = vmatpush1.bf16.msra.mxu0 0
      %1875 = vmatprep.subr.bf16.mxu0 0
      %1876 = vmatpush1.bf16.msra.mxu0 0
      %1877 = vmatprep.subr.bf16.mxu0 0
      %1878 = vmatpush1.bf16.msra.mxu0 0
      %1879 = vmatprep.subr.bf16.mxu0 0
      %1880 = vmatpush1.bf16.msra.mxu0 0
      %1881 = vmatprep.subr.bf16.mxu0 0
      %1882 = vmatpush1.bf16.msra.mxu0 0
      %1883 = vmatprep.subr.bf16.mxu0 0
      %1884 = vmatpush1.bf16.msra.mxu0 0
      %1885 = vmatprep.subr.bf16.mxu0 0
      %1886 = vmatpush1.bf16.msra.mxu0 0
      %1887 = vmatprep.mubr.bf16.mxu0 0
      %1888 = vmatmul.mubr.bf16.gmra.mrb[0].mxu0 %v1841
      %v1889 = vpop.f32.mrb[0].mxu0
      %v1890 = vadd.f32 0.0, %v1889
      %v1891 = vpop.f32.mrb[0].mxu0
      %v1892 = vpop.f32.mrb[0].mxu0
      %v1893 = vadd.f32 0.0, %v1892
      %v1894 = vpop.f32.mrb[0].mxu0
      %1895 = vmatprep.mubr.bf16.mxu0 0
      %1896 = vmatmul.mubr.bf16.gmra.mrb[0].mxu0 %v1844
      %v1897 = vpop.f32.mrb[0].mxu0
      %v1898 = vadd.f32 0.0, %v1897
      %v1899 = vpop.f32.mrb[0].mxu0
      %v1900 = vpop.f32.mrb[0].mxu0
      %v1901 = vadd.f32 0.0, %v1900
      %v1902 = vpop.f32.mrb[0].mxu0
      %1903 = vmatprep.mubr.bf16.mxu0 0
      %1904 = vmatmul.mubr.bf16.gmra.mrb[0].mxu0 %v1847
      %v1905 = vpop.f32.mrb[0].mxu0
      %v1906 = vadd.f32 0.0, %v1905
      %v1907 = vpop.f32.mrb[0].mxu0
      %v1908 = vpop.f32.mrb[0].mxu0
      %v1909 = vadd.f32 0.0, %v1908
      %v1910 = vpop.f32.mrb[0].mxu0
      %1911 = vmatprep.mubr.bf16.mxu0 0
      %1912 = vmatmul.mubr.bf16.gmra.mrb[0].mxu0 %v1850
      %v1913 = vpop.f32.mrb[0].mxu0
      %v1914 = vadd.f32 0.0, %v1913
      %v1915 = vpop.f32.mrb[0].mxu0
      %v1916 = vpop.f32.mrb[0].mxu0
      %v1917 = vadd.f32 0.0, %v1916
      %v1918 = vpop.f32.mrb[0].mxu0
      %1919 = vdwg.mxu0
      %v1920 = vadd.f32 %v1808, %v1890
      %v1921 = vadd.f32 %v1809, %v1893
      %v1922 = vadd.f32 %v1810, %v1898
      %v1923 = vadd.f32 %v1811, %v1901
      %v1924 = vadd.f32 %v1812, %v1906
      %v1925 = vadd.f32 %v1813, %v1909
      %v1926 = vadd.f32 %v1814, %v1914
      %v1927 = vadd.f32 %v1815, %v1917
      %v1928 = vmax.f32 %v1226, 0.0
      %v1929 = vmax.f32 %v1227, 0.0
      %v1930 = vmax.f32 %v1228, 0.0
      %v1931 = vmax.f32 %v1229, 0.0
      %v1932 = vmax.f32 %v1230, 0.0
      %v1933 = vmax.f32 %v1231, 0.0
      %v1934 = vmax.f32 %v1232, 0.0
      %v1935 = vmax.f32 %v1233, 0.0
      %v1936 = vmax.f32 %v1920, 0.0
      %v1937 = vmax.f32 %v1921, 0.0
      %v1938 = vmax.f32 %v1922, 0.0
      %v1939 = vmax.f32 %v1923, 0.0
      %v1940 = vmax.f32 %v1924, 0.0
      %v1941 = vmax.f32 %v1925, 0.0
      %v1942 = vmax.f32 %v1926, 0.0
      %v1943 = vmax.f32 %v1927, 0.0
      %v1944 = vadd.f32 %v1928, %v1936
      %v1945 = vadd.f32 %v1929, %v1937
      %v1946 = vadd.f32 %v1930, %v1938
      %v1947 = vadd.f32 %v1931, %v1939
      %v1948 = vadd.f32 %v1932, %v1940
      %v1949 = vadd.f32 %v1933, %v1941
      %v1950 = vadd.f32 %v1934, %v1942
      %v1951 = vadd.f32 %v1935, %v1943
      %v1952 = vld [vmem:[%s9] sm:$0x1]
      %v1954 = vlaneseq
      %v1955 = vshrl.u32 %v1954, 7
      %v1956 = vsub.s32 0, %v1955
      %v1957 = vrot.slane %v1952, %v1956
      %v1959 = vmul.f32 %v1944, %v1957
      %v1960 = vmul.f32 %v1945, %v1957
      %v1961 = vmul.f32 %v1946, %v1957
      %v1962 = vmul.f32 %v1947, %v1957
      %v1963 = vmul.f32 %v1948, %v1957
      %v1964 = vmul.f32 %v1949, %v1957
      %v1965 = vmul.f32 %v1950, %v1957
      %v1966 = vmul.f32 %v1951, %v1957
      %v1967 = vsel %vm719, %v1959, 0.0
      %1968 = vadd.xlane.f32.xlu0 %v1967
      %v1969 = vpop.xlane.xlu0 %1968
      %v1970 = vsel %vm719, %v1960, 0.0
      %1971 = vadd.xlane.f32.xlu0 %v1970
      %v1972 = vpop.xlane.xlu0 %1971
      %v1973 = vsel %vm719, %v1961, 0.0
      %1974 = vadd.xlane.f32.xlu0 %v1973
      %v1975 = vpop.xlane.xlu0 %1974
      %v1976 = vsel %vm719, %v1962, 0.0
      %1977 = vadd.xlane.f32.xlu0 %v1976
      %v1978 = vpop.xlane.xlu0 %1977
      %v1979 = vsel %vm719, %v1963, 0.0
      %1980 = vadd.xlane.f32.xlu0 %v1979
      %v1981 = vpop.xlane.xlu0 %1980
      %v1982 = vsel %vm719, %v1964, 0.0
      %1983 = vadd.xlane.f32.xlu0 %v1982
      %v1984 = vpop.xlane.xlu0 %1983
      %v1985 = vsel %vm719, %v1965, 0.0
      %1986 = vadd.xlane.f32.xlu0 %v1985
      %v1987 = vpop.xlane.xlu0 %1986
      %v1988 = vsel %vm719, %v1966, 0.0
      %1989 = vadd.xlane.f32.xlu0 %v1988
      %v1990 = vpop.xlane.xlu0 %1989
      %v1991 = vld [vmem:[#allocation2] sm:$0x1]
      %v1993 = vlaneseq
      %v1994 = vshrl.u32 %v1993, 7
      %v1995 = vsub.s32 0, %v1994
      %v1996 = vrot.slane %v1991, %v1995
      %v1998 = vadd.f32 %v1969, %v1996
      %v1999 = vadd.f32 %v1972, %v1996
      %v2000 = vadd.f32 %v1975, %v1996
      %v2001 = vadd.f32 %v1978, %v1996
      %v2002 = vadd.f32 %v1981, %v1996
      %v2003 = vadd.f32 %v1984, %v1996
      %v2004 = vadd.f32 %v1987, %v1996
      %v2005 = vadd.f32 %v1990, %v1996
      %v2006 = vxor.u32 %v1998, 2147483648
      %v2007 = vxor.u32 %v1999, 2147483648
      %v2008 = vxor.u32 %v2000, 2147483648
      %v2009 = vxor.u32 %v2001, 2147483648
      %v2010 = vxor.u32 %v2002, 2147483648
      %v2011 = vxor.u32 %v2003, 2147483648
      %v2012 = vxor.u32 %v2004, 2147483648
      %v2013 = vxor.u32 %v2005, 2147483648
      %v2014 = vmul.f32 %v2006, 1.442695
      %v2015 = vpow.pop %v2014
      %v2016 = vmul.f32 %v2007, 1.442695
      %v2017 = vpow.pop %v2016
      %v2018 = vmul.f32 %v2008, 1.442695
      %v2019 = vpow.pop %v2018
      %v2020 = vmul.f32 %v2009, 1.442695
      %v2021 = vpow.pop %v2020
      %v2022 = vmul.f32 %v2010, 1.442695
      %v2023 = vpow.pop %v2022
      %v2024 = vmul.f32 %v2011, 1.442695
      %v2025 = vpow.pop %v2024
      %v2026 = vmul.f32 %v2012, 1.442695
      %v2027 = vpow.pop %v2026
      %v2028 = vmul.f32 %v2013, 1.442695
      %v2029 = vpow.pop %v2028
      %v2030 = vadd.f32 %v2015, 1.0
      %v2031 = vadd.f32 %v2017, 1.0
      %v2032 = vadd.f32 %v2019, 1.0
      %v2033 = vadd.f32 %v2021, 1.0
      %v2034 = vadd.f32 %v2023, 1.0
      %v2035 = vadd.f32 %v2025, 1.0
      %v2036 = vadd.f32 %v2027, 1.0
      %v2037 = vadd.f32 %v2029, 1.0
      %v2038 = vrcp.pop %v2030
      %v2039 = vmul.f32 1.0, %v2038
      %v2040 = vrcp.pop %v2031
      %v2041 = vmul.f32 1.0, %v2040
      %v2042 = vrcp.pop %v2032
      %v2043 = vmul.f32 1.0, %v2042
      %v2044 = vrcp.pop %v2033
      %v2045 = vmul.f32 1.0, %v2044
      %v2046 = vrcp.pop %v2034
      %v2047 = vmul.f32 1.0, %v2046
      %v2048 = vrcp.pop %v2035
      %v2049 = vmul.f32 1.0, %v2048
      %v2050 = vrcp.pop %v2036
      %v2051 = vmul.f32 1.0, %v2050
      %v2052 = vrcp.pop %v2037
      %v2053 = vmul.f32 1.0, %v2052
      %v2054 = vunpack.c.l.bf16 %v1234
      %v2055 = vunpack.c.l.bf16 %v1235
      %v2056 = vunpack.c.l.bf16 %v1236
      %v2057 = vunpack.c.l.bf16 %v1237
      %v2058 = vunpack.c.l.bf16 %v1238
      %v2059 = vunpack.c.l.bf16 %v1239
      %v2060 = vunpack.c.l.bf16 %v1240
      %v2061 = vunpack.c.l.bf16 %v1241
      %v2062 = vunpack.c.l.bf16 %v1242
      %v2063 = vunpack.c.l.bf16 %v1243
      %v2064 = vunpack.c.l.bf16 %v1244
      %v2065 = vunpack.c.l.bf16 %v1245
      %v2066 = vunpack.c.l.bf16 %v1246
      %v2067 = vunpack.c.l.bf16 %v1247
      %v2068 = vunpack.c.l.bf16 %v1248
      %v2069 = vunpack.c.l.bf16 %v1249
      %2071 = vset.pattern.permute.xlu0 0
      %2072 = vperm.xlu0 %2071, %v2039
      %v2073 = vpop.permute.xlu0 %2072
      %2076 = vset.pattern.permute.xlu0 0
      %2077 = vperm.xlu0 %2076, %v2041
      %v2078 = vpop.permute.xlu0 %2077
      %2081 = vset.pattern.permute.xlu0 0
      %2082 = vperm.xlu0 %2081, %v2043
      %v2083 = vpop.permute.xlu0 %2082
      %2086 = vset.pattern.permute.xlu0 0
      %2087 = vperm.xlu0 %2086, %v2045
      %v2088 = vpop.permute.xlu0 %2087
      %2091 = vset.pattern.permute.xlu0 0
      %2092 = vperm.xlu0 %2091, %v2047
      %v2093 = vpop.permute.xlu0 %2092
      %2096 = vset.pattern.permute.xlu0 0
      %2097 = vperm.xlu0 %2096, %v2049
      %v2098 = vpop.permute.xlu0 %2097
      %2101 = vset.pattern.permute.xlu0 0
      %2102 = vperm.xlu0 %2101, %v2051
      %v2103 = vpop.permute.xlu0 %2102
      %2106 = vset.pattern.permute.xlu0 0
      %2107 = vperm.xlu0 %2106, %v2053
      %v2108 = vpop.permute.xlu0 %2107
      %v2110 = vmul.f32 %v2073, %v2054
      %v2111 = vmul.f32 %v2073, %v2055
      %v2112 = vmul.f32 %v2078, %v2056
      %v2113 = vmul.f32 %v2078, %v2057
      %v2114 = vmul.f32 %v2083, %v2058
      %v2115 = vmul.f32 %v2083, %v2059
      %v2116 = vmul.f32 %v2088, %v2060
      %v2117 = vmul.f32 %v2088, %v2061
      %v2118 = vmul.f32 %v2093, %v2062
      %v2119 = vmul.f32 %v2093, %v2063
      %v2120 = vmul.f32 %v2098, %v2064
      %v2121 = vmul.f32 %v2098, %v2065
      %v2122 = vmul.f32 %v2103, %v2066
      %v2123 = vmul.f32 %v2103, %v2067
      %v2124 = vmul.f32 %v2108, %v2068
      %v2125 = vmul.f32 %v2108, %v2069
      %v2126 = vpack.c.bf16 %v2110, %v2110
      %v2127 = vpack.c.bf16 %v2111, %v2111
      %v2128 = vpack.c.bf16 %v2112, %v2112
      %v2129 = vpack.c.bf16 %v2113, %v2113
      %v2130 = vpack.c.bf16 %v2114, %v2114
      %v2131 = vpack.c.bf16 %v2115, %v2115
      %v2132 = vpack.c.bf16 %v2116, %v2116
      %v2133 = vpack.c.bf16 %v2117, %v2117
      %v2134 = vpack.c.bf16 %v2118, %v2118
      %v2135 = vpack.c.bf16 %v2119, %v2119
      %v2136 = vpack.c.bf16 %v2120, %v2120
      %v2137 = vpack.c.bf16 %v2121, %v2121
      %v2138 = vpack.c.bf16 %v2122, %v2122
      %v2139 = vpack.c.bf16 %v2123, %v2123
      %v2140 = vpack.c.bf16 %v2124, %v2124
      %v2141 = vpack.c.bf16 %v2125, %v2125
      %vm2142 = vcmask 125952
      %2143 = vst.msk [vmem:[%s639] sm:$0xf] %vm2142, %v2126
      %2144 = vst.msk [vmem:[%s639 + $0x4] sm:$0xf] %vm2142, %v2127
      %2145 = vst.msk [vmem:[%s639 + $0x8] sm:$0xf] %vm2142, %v2128
      %2146 = vst.msk [vmem:[%s639 + $0xc] sm:$0xf] %vm2142, %v2129
      %2147 = vst.msk [vmem:[%s639 + $0x10] sm:$0xf] %vm2142, %v2130
      %2148 = vst.msk [vmem:[%s639 + $0x14] sm:$0xf] %vm2142, %v2131
      %2149 = vst.msk [vmem:[%s639 + $0x18] sm:$0xf] %vm2142, %v2132
      %2150 = vst.msk [vmem:[%s639 + $0x1c] sm:$0xf] %vm2142, %v2133
      %2151 = vst.msk [vmem:[%s639 + $0x20] sm:$0xf] %vm2142, %v2134
      %2152 = vst.msk [vmem:[%s639 + $0x24] sm:$0xf] %vm2142, %v2135
      %2153 = vst.msk [vmem:[%s639 + $0x28] sm:$0xf] %vm2142, %v2136
      %2154 = vst.msk [vmem:[%s639 + $0x2c] sm:$0xf] %vm2142, %v2137
      %2155 = vst.msk [vmem:[%s639 + $0x30] sm:$0xf] %vm2142, %v2138
      %2156 = vst.msk [vmem:[%s639 + $0x34] sm:$0xf] %vm2142, %v2139
      %2157 = vst.msk [vmem:[%s639 + $0x38] sm:$0xf] %vm2142, %v2140
      %2158 = vst.msk [vmem:[%s639 + $0x3c] sm:$0xf] %vm2142, %v2141
      %s2159 = smul.u32 16, %s29
      %p2160 = scmp.lt.s32.totalorder %s28, 1
      %s2161 = scalar_select %p2160, %s28, 1
      %p2162 = scmp.lt.s32.totalorder %s2159, 15
      %s2163 = scalar_select %p2162, %s2159, 15
      %s2164 = smul.addr %s2161, 16
      %s2165 = sadd.s32 %s2163, %s2164
      %s2166 = smul.addr %s2165, 4
      %s2167 = scalar_lea.vmem %s11, %s2166
      // Predicated region
      $region65: #{attention_gate.1} parent=63 // pred_check
        %p2168 = pneg %p346
      $region66: #{attention_gate.1} parent=63 // pred_check_branch
        %2170 = sbr.rel (%p2168) target = $region68
      $region67: #{attention_gate.1} parent=63 // pred_region
        %s2171 = smul.u32 16, %s29
      $region68: #{attention_gate.1} parent=63 // pred_fallthru
        _
    $region64: #{attention_gate.1} parent=5 // pred_fallthru
      _
    %p2172 = scmp.le.s32.totalorder 2, %s19
    // Predicated region
    $region69: #{attention_gate.1} parent=5 // pred_check
      %p2173 = pneg %p2172
    $region70: #{attention_gate.1} parent=5 // pred_check_branch
      %2175 = sbr.rel (%p2173) target = $region72
    $region71: #{attention_gate.1} parent=5 // pred_region
      %s2176 = ssub.s32 %s19, 2
      // Predicated region
      $region73: #{attention_gate.1} parent=71 // pred_check
        %p2177 = pneg %p352
      $region74: #{attention_gate.1} parent=71 // pred_check_branch
        %2179 = sbr.rel (%p2177) target = $region76
      $region75: #{attention_gate.1} parent=71 // pred_region
        %s2180 = smul.u32 16, %s31
        %p2181 = scmp.lt.s32.totalorder %s30, 1
        %s2182 = scalar_select %p2181, %s30, 1
        %p2183 = scmp.lt.s32.totalorder %s2180, 15
        %s2184 = scalar_select %p2183, %s2180, 15
        %s2185 = smul.addr %s2182, 16
        %s2186 = sadd.s32 %s2184, %s2185
        %s2187 = smul.addr %s2186, 4
        %s2188 = scalar_lea.vmem %s11, %s2187
      $region76: #{attention_gate.1} parent=71 // pred_fallthru
        _
    $region72: #{attention_gate.1} parent=5 // pred_fallthru
      _
  $region6: #{attention_gate.1} parent=0 // loop_footer
    %s23 = sadd.s32 1, %s19
  $region7: #{attention_gate.1} parent=0 // loop_footer_branch
    %18 = sbr.rel target = $region3
  $region8: #{attention_gate.1} parent=0 // loop_exit
    _

</llo_original>
